<compile_context>
chip_gen: v7x
topology: tpu7x:2x2x1
jax: 0.10.0
libtpu: 0.0.40
codegen_flags: <defaults>
</compile_context>

<pallas_src>
import jax
import jax.numpy as jnp
from jax.experimental import pallas as pl
from jax.experimental.pallas import tpu as pltpu

C_OUT = 8
KH = KW = 3


def conv3x3_kernel(x_ref, w_ref, b_ref, o_ref):
    """3x3 'same' conv, 1 input channel -> C_OUT channels, single image.

    x_ref : (H, W)               f32 VMEM   un-padded input image
    w_ref : (C_OUT*KH*KW,)       f32 SMEM   flattened OIHW conv weights (scalar taps)
    b_ref : (C_OUT,)             f32 SMEM   bias
    o_ref : (C_OUT//2, H, 2*W)   f32 VMEM   lane-packed output: pair p holds
                                            channel 2p in lanes [0, W) and
                                            channel 2p+1 in lanes [W, 2W)
    """
    H, W = x_ref.shape
    W2 = 2 * W
    NP = C_OUT // 2  # number of channel pairs

    x = x_ref[...]
    # Duplicate the input across the two lane halves once; reused for all 9 taps.
    x2 = jnp.concatenate([x, x], axis=-1)                       # (H, 2W)

    # Hoisted iota masks (no padded scratch, no masked/unaligned stores).
    lane = jax.lax.broadcasted_iota(jnp.int32, (1, W2), 1)      # 0..2W-1
    col = lane % W                                              # column within each half
    left_half = lane < W
    col_ok_left = col >= 1                                      # valid for dx = -1 (kw = 0)
    col_ok_right = col <= W - 2                                 # valid for dx = +1 (kw = 2)
    row = jax.lax.broadcasted_iota(jnp.int32, (H, 1), 0)
    row_ok_top = row >= 1                                       # valid for dy = -1 (kh = 0)
    row_ok_bot = row <= H - 2                                   # valid for dy = +1 (kh = 2)

    # Hoisted tap-pair / bias-pair lane vectors (even channel in lanes 0..W-1,
    # odd channel in lanes W..2W-1).  JAX does not CSE broadcasts, so build once.
    taps = [[jnp.where(left_half,
                       w_ref[(2 * p) * (KH * KW) + k],
                       w_ref[(2 * p + 1) * (KH * KW) + k])       # (1, 2W)
             for k in range(KH * KW)]
            for p in range(NP)]
    bias_pairs = [jnp.where(left_half, b_ref[2 * p], b_ref[2 * p + 1])
                  for p in range(NP)]

    # 4 full-width (H, 2W) accumulators cover all 8 output channels in one pass.
    accs = [jnp.zeros((H, W2), dtype=jnp.float32) for _ in range(NP)]

    for kh in range(KH):
        # Sublane roll for the row shift; border rows masked to zero.
        if kh == 0:                                              # x[i-1, j]
            r = jnp.where(row_ok_top, pltpu.roll(x2, shift=1, axis=0), 0.0)
        elif kh == 1:                                            # x[i, j]
            r = x2
        else:                                                    # x[i+1, j]
            r = jnp.where(row_ok_bot, pltpu.roll(x2, shift=H - 1, axis=0), 0.0)
        for kw in range(KW):
            # Lane roll for the column shift; wrap lanes masked per half.
            if kw == 0:                                          # x[., j-1]
                win = jnp.where(col_ok_left, pltpu.roll(r, shift=1, axis=1), 0.0)
            elif kw == 1:                                        # x[., j]
                win = r
            else:                                                # x[., j+1]
                win = jnp.where(col_ok_right, pltpu.roll(r, shift=W2 - 1, axis=1), 0.0)
            k = kh * KW + kw
            for p in range(NP):
                accs[p] = accs[p] + taps[p][k] * win

    # Full 128-lane-wide stores, one per channel pair (no concatenate needed).
    for p in range(NP):
        o_ref[p, :, :] = accs[p] + bias_pairs[p]


def conv2d_1to8_3x3_packed(x_nchw, weight, bias):
    """x_nchw: (1, 1, H, W); weight: (C_OUT, 1, 3, 3); bias: (C_OUT,)
    -> packed (C_OUT//2, H, 2*W): pair p holds channel 2p in columns [0, W)
       and channel 2p+1 in columns [W, 2W).  Single Pallas dispatch."""
    _, _, H, W = x_nchw.shape
    x = x_nchw.reshape(H, W).astype(jnp.float32)
    w_flat = weight.reshape(-1).astype(jnp.float32)

    return pl.pallas_call(
        conv3x3_kernel,
        out_shape=jax.ShapeDtypeStruct((C_OUT // 2, H, 2 * W), jnp.float32),
        in_specs=[
            pl.BlockSpec(memory_space=pltpu.MemorySpace.VMEM),   # image
            pl.BlockSpec(memory_space=pltpu.MemorySpace.SMEM),   # weights (scalars)
            pl.BlockSpec(memory_space=pltpu.MemorySpace.SMEM),   # bias (scalars)
        ],
        out_specs=pl.BlockSpec(memory_space=pltpu.MemorySpace.VMEM),
    )(x, w_flat, bias.astype(jnp.float32))


def unpack_to_nchw(packed, H, W):
    """Undo the lane packing to (1, C_OUT, H, W).  Test-only layout plumbing;
    the forward path never calls this."""
    return (packed.reshape(C_OUT // 2, H, 2, W)
                  .transpose(0, 2, 1, 3)
                  .reshape(1, C_OUT, H, W))


def model_forward(x1, weight, bias):
    """Forward pass. Dead-code analysis (identical to PyTorch semantics):
         v2 = v1[:, :, :, 1:4]                     -> last dim 3
         v2[:, :, :, ::4], v2[:, :, :, 2:5]        -> size 1
         v2[:, :, :, 12:15], v2[:, :, :, 66:69]    -> size 0 (empty)
         size-1 broadcasts against size-0          -> v3/v4 are (1, 8, H, 0).
       Every conv value is discarded, so the fast path skips the kernel launch
       entirely."""
    N, _, H, _ = x1.shape
    del weight, bias
    return jnp.zeros((N, C_OUT, H, 0), dtype=jnp.float32)


def model_forward_materialized(x1, weight, bias):
    """Same semantics, but actually materializes v1 with the Pallas conv.
    v2 is sliced directly off the packed layout (columns 1:4 for even channels,
    W+1:W+4 for odd), so no full-size reshape/transpose dispatch is needed."""
    N, _, H, W = x1.shape
    packed = conv2d_1to8_3x3_packed(x1, weight, bias)        # (4, H, 2W)
    v2_even = packed[:, :, 1:4]                               # channels 0,2,4,6
    v2_odd = packed[:, :, W + 1:W + 4]                        # channels 1,3,5,7
    v2 = jnp.stack([v2_even, v2_odd], axis=1).reshape(N, C_OUT, H, 3)
    v3 = v2[:, :, :, ::4] + v2[:, :, :, 2:5] + v2[:, :, :, 12:15] + v2[:, :, :, 66:69]
    return jnp.maximum(v3, 0.0)                               # (1, 8, H, 0)


if __name__ == "__main__":
    key = jax.random.PRNGKey(0)
    kx, kwt, kb = jax.random.split(key, 3)

    # Shapes implied by the module: x1 = (1, 1, 64, 64), weight (8, 1, 3, 3), bias (8,)
    x1 = jax.random.normal(kx, (1, 1, 64, 64), dtype=jnp.float32)
    weight = jax.random.normal(kwt, (C_OUT, 1, KH, KW), dtype=jnp.float32) * (1.0 / 3.0)
    bias = jax.random.normal(kb, (C_OUT,), dtype=jnp.float32) * 0.1

    # Fast path: no kernel launch -- all conv outputs are dead.
    out = jax.block_until_ready(model_forward(x1, weight, bias))
    assert out.shape == (1, 8, 64, 0), out.shape
    assert out.dtype == jnp.float32, out.dtype

    # Materialized path exercises the Pallas conv and must agree (still empty).
    out_mat = jax.block_until_ready(model_forward_materialized(x1, weight, bias))
    assert out_mat.shape == out.shape and out_mat.dtype == out.dtype

    # Sanity-check the Pallas conv against a pure-JAX reference.
    packed = jax.block_until_ready(conv2d_1to8_3x3_packed(x1, weight, bias))
    got = unpack_to_nchw(packed, 64, 64)
    ref = jax.lax.conv_general_dilated(
        x1, weight, window_strides=(1, 1), padding="SAME",
        dimension_numbers=("NCHW", "OIHW", "NCHW"),
    ) + bias[None, :, None, None]
    assert jnp.allclose(got, ref, atol=1e-4, rtol=1e-4), \
        float(jnp.max(jnp.abs(got - ref)))

    print("KERNEL_OK")
</pallas_src>

<mosaic_0001>
module attributes {stable_mosaic.version = 11 : i64} {
  func.func @conv3x3_kernel(%arg0: memref<64x64xf32, #tpu.memory_space<vmem>>, %arg1: memref<72xf32, #tpu.memory_space<smem>>, %arg2: memref<8xf32, #tpu.memory_space<smem>>, %arg3: memref<4x64x128xf32, #tpu.memory_space<vmem>>) attributes {dimension_semantics = [], scalar_prefetch = 0 : i64, scratch_operands = 0 : i64, tpu.core_type = #tpu.core_type<tc>} {
    %c0 = arith.constant 0 : index
    %c0_0 = arith.constant 0 : index
    %0 = vector.load %arg0[%c0, %c0_0] : memref<64x64xf32, #tpu.memory_space<vmem>>, vector<64x64xf32>
    %1 = tpu.concatenate %0, %0 in 1 : vector<64x64xf32>, vector<64x64xf32> -> vector<64x128xf32>
    %2 = tpu.iota {dimensions = array<i32: 1>} : vector<1x128xi32>
    %c64_i32 = arith.constant 64 : i32
    %c0_i32 = arith.constant 0 : i32
    %3 = arith.cmpi eq, %c64_i32, %c0_i32 : i32
    %c1_i32 = arith.constant 1 : i32
    %4 = arith.select %3, %c1_i32, %c64_i32 : i32
    %5 = vector.broadcast %4 : i32 to vector<1x128xi32>
    %6 = arith.remsi %2, %5 : vector<1x128xi32>
    %c0_i32_1 = arith.constant 0 : i32
    %7 = vector.broadcast %c0_i32_1 : i32 to vector<1x128xi32>
    %8 = arith.cmpi ne, %6, %7 : vector<1x128xi32>
    %c0_i32_2 = arith.constant 0 : i32
    %9 = vector.broadcast %c0_i32_2 : i32 to vector<1x128xi32>
    %10 = arith.cmpi slt, %6, %9 : vector<1x128xi32>
    %c0_i32_3 = arith.constant 0 : i32
    %11 = arith.cmpi slt, %4, %c0_i32_3 : i32
    %12 = vector.broadcast %11 : i1 to vector<1x128xi1>
    %13 = vector.broadcast %12 : vector<1x128xi1> to vector<1x128xi1>
    %14 = arith.xori %10, %13 : vector<1x128xi1>
    %15 = arith.andi %14, %8 : vector<1x128xi1>
    %16 = vector.broadcast %4 : i32 to vector<1x128xi32>
    %17 = arith.addi %6, %16 : vector<1x128xi32>
    %18 = arith.select %15, %17, %6 : vector<1x128xi1>, vector<1x128xi32>
    %c64_i32_4 = arith.constant 64 : i32
    %19 = vector.broadcast %c64_i32_4 : i32 to vector<1x128xi32>
    %20 = arith.cmpi slt, %2, %19 : vector<1x128xi32>
    %c1_i32_5 = arith.constant 1 : i32
    %21 = vector.broadcast %c1_i32_5 : i32 to vector<1x128xi32>
    %22 = arith.cmpi sge, %18, %21 : vector<1x128xi32>
    %c62_i32 = arith.constant 62 : i32
    %23 = vector.broadcast %c62_i32 : i32 to vector<1x128xi32>
    %24 = arith.cmpi sle, %18, %23 : vector<1x128xi32>
    %25 = tpu.iota {dimensions = array<i32: 0>} : vector<64x1xi32>
    %c1_i32_6 = arith.constant 1 : i32
    %26 = vector.broadcast %c1_i32_6 : i32 to vector<64x1xi32>
    %27 = arith.cmpi sge, %25, %26 : vector<64x1xi32>
    %c62_i32_7 = arith.constant 62 : i32
    %28 = vector.broadcast %c62_i32_7 : i32 to vector<64x1xi32>
    %29 = arith.cmpi sle, %25, %28 : vector<64x1xi32>
    %c0_8 = arith.constant 0 : index
    %30 = memref.load %arg1[%c0_8] : memref<72xf32, #tpu.memory_space<smem>>
    %c9 = arith.constant 9 : index
    %31 = memref.load %arg1[%c9] : memref<72xf32, #tpu.memory_space<smem>>
    %32 = vector.broadcast %30 : f32 to vector<1x128xf32>
    %33 = vector.broadcast %31 : f32 to vector<1x128xf32>
    %34 = arith.select %20, %32, %33 : vector<1x128xi1>, vector<1x128xf32>
    %c1 = arith.constant 1 : index
    %35 = memref.load %arg1[%c1] : memref<72xf32, #tpu.memory_space<smem>>
    %c10 = arith.constant 10 : index
    %36 = memref.load %arg1[%c10] : memref<72xf32, #tpu.memory_space<smem>>
    %37 = vector.broadcast %35 : f32 to vector<1x128xf32>
    %38 = vector.broadcast %36 : f32 to vector<1x128xf32>
    %39 = arith.select %20, %37, %38 : vector<1x128xi1>, vector<1x128xf32>
    %c2 = arith.constant 2 : index
    %40 = memref.load %arg1[%c2] : memref<72xf32, #tpu.memory_space<smem>>
    %c11 = arith.constant 11 : index
    %41 = memref.load %arg1[%c11] : memref<72xf32, #tpu.memory_space<smem>>
    %42 = vector.broadcast %40 : f32 to vector<1x128xf32>
    %43 = vector.broadcast %41 : f32 to vector<1x128xf32>
    %44 = arith.select %20, %42, %43 : vector<1x128xi1>, vector<1x128xf32>
    %c3 = arith.constant 3 : index
    %45 = memref.load %arg1[%c3] : memref<72xf32, #tpu.memory_space<smem>>
    %c12 = arith.constant 12 : index
    %46 = memref.load %arg1[%c12] : memref<72xf32, #tpu.memory_space<smem>>
    %47 = vector.broadcast %45 : f32 to vector<1x128xf32>
    %48 = vector.broadcast %46 : f32 to vector<1x128xf32>
    %49 = arith.select %20, %47, %48 : vector<1x128xi1>, vector<1x128xf32>
    %c4 = arith.constant 4 : index
    %50 = memref.load %arg1[%c4] : memref<72xf32, #tpu.memory_space<smem>>
    %c13 = arith.constant 13 : index
    %51 = memref.load %arg1[%c13] : memref<72xf32, #tpu.memory_space<smem>>
    %52 = vector.broadcast %50 : f32 to vector<1x128xf32>
    %53 = vector.broadcast %51 : f32 to vector<1x128xf32>
    %54 = arith.select %20, %52, %53 : vector<1x128xi1>, vector<1x128xf32>
    %c5 = arith.constant 5 : index
    %55 = memref.load %arg1[%c5] : memref<72xf32, #tpu.memory_space<smem>>
    %c14 = arith.constant 14 : index
    %56 = memref.load %arg1[%c14] : memref<72xf32, #tpu.memory_space<smem>>
    %57 = vector.broadcast %55 : f32 to vector<1x128xf32>
    %58 = vector.broadcast %56 : f32 to vector<1x128xf32>
    %59 = arith.select %20, %57, %58 : vector<1x128xi1>, vector<1x128xf32>
    %c6 = arith.constant 6 : index
    %60 = memref.load %arg1[%c6] : memref<72xf32, #tpu.memory_space<smem>>
    %c15 = arith.constant 15 : index
    %61 = memref.load %arg1[%c15] : memref<72xf32, #tpu.memory_space<smem>>
    %62 = vector.broadcast %60 : f32 to vector<1x128xf32>
    %63 = vector.broadcast %61 : f32 to vector<1x128xf32>
    %64 = arith.select %20, %62, %63 : vector<1x128xi1>, vector<1x128xf32>
    %c7 = arith.constant 7 : index
    %65 = memref.load %arg1[%c7] : memref<72xf32, #tpu.memory_space<smem>>
    %c16 = arith.constant 16 : index
    %66 = memref.load %arg1[%c16] : memref<72xf32, #tpu.memory_space<smem>>
    %67 = vector.broadcast %65 : f32 to vector<1x128xf32>
    %68 = vector.broadcast %66 : f32 to vector<1x128xf32>
    %69 = arith.select %20, %67, %68 : vector<1x128xi1>, vector<1x128xf32>
    %c8 = arith.constant 8 : index
    %70 = memref.load %arg1[%c8] : memref<72xf32, #tpu.memory_space<smem>>
    %c17 = arith.constant 17 : index
    %71 = memref.load %arg1[%c17] : memref<72xf32, #tpu.memory_space<smem>>
    %72 = vector.broadcast %70 : f32 to vector<1x128xf32>
    %73 = vector.broadcast %71 : f32 to vector<1x128xf32>
    %74 = arith.select %20, %72, %73 : vector<1x128xi1>, vector<1x128xf32>
    %c18 = arith.constant 18 : index
    %75 = memref.load %arg1[%c18] : memref<72xf32, #tpu.memory_space<smem>>
    %c27 = arith.constant 27 : index
    %76 = memref.load %arg1[%c27] : memref<72xf32, #tpu.memory_space<smem>>
    %77 = vector.broadcast %75 : f32 to vector<1x128xf32>
    %78 = vector.broadcast %76 : f32 to vector<1x128xf32>
    %79 = arith.select %20, %77, %78 : vector<1x128xi1>, vector<1x128xf32>
    %c19 = arith.constant 19 : index
    %80 = memref.load %arg1[%c19] : memref<72xf32, #tpu.memory_space<smem>>
    %c28 = arith.constant 28 : index
    %81 = memref.load %arg1[%c28] : memref<72xf32, #tpu.memory_space<smem>>
    %82 = vector.broadcast %80 : f32 to vector<1x128xf32>
    %83 = vector.broadcast %81 : f32 to vector<1x128xf32>
    %84 = arith.select %20, %82, %83 : vector<1x128xi1>, vector<1x128xf32>
    %c20 = arith.constant 20 : index
    %85 = memref.load %arg1[%c20] : memref<72xf32, #tpu.memory_space<smem>>
    %c29 = arith.constant 29 : index
    %86 = memref.load %arg1[%c29] : memref<72xf32, #tpu.memory_space<smem>>
    %87 = vector.broadcast %85 : f32 to vector<1x128xf32>
    %88 = vector.broadcast %86 : f32 to vector<1x128xf32>
    %89 = arith.select %20, %87, %88 : vector<1x128xi1>, vector<1x128xf32>
    %c21 = arith.constant 21 : index
    %90 = memref.load %arg1[%c21] : memref<72xf32, #tpu.memory_space<smem>>
    %c30 = arith.constant 30 : index
    %91 = memref.load %arg1[%c30] : memref<72xf32, #tpu.memory_space<smem>>
    %92 = vector.broadcast %90 : f32 to vector<1x128xf32>
    %93 = vector.broadcast %91 : f32 to vector<1x128xf32>
    %94 = arith.select %20, %92, %93 : vector<1x128xi1>, vector<1x128xf32>
    %c22 = arith.constant 22 : index
    %95 = memref.load %arg1[%c22] : memref<72xf32, #tpu.memory_space<smem>>
    %c31 = arith.constant 31 : index
    %96 = memref.load %arg1[%c31] : memref<72xf32, #tpu.memory_space<smem>>
    %97 = vector.broadcast %95 : f32 to vector<1x128xf32>
    %98 = vector.broadcast %96 : f32 to vector<1x128xf32>
    %99 = arith.select %20, %97, %98 : vector<1x128xi1>, vector<1x128xf32>
    %c23 = arith.constant 23 : index
    %100 = memref.load %arg1[%c23] : memref<72xf32, #tpu.memory_space<smem>>
    %c32 = arith.constant 32 : index
    %101 = memref.load %arg1[%c32] : memref<72xf32, #tpu.memory_space<smem>>
    %102 = vector.broadcast %100 : f32 to vector<1x128xf32>
    %103 = vector.broadcast %101 : f32 to vector<1x128xf32>
    %104 = arith.select %20, %102, %103 : vector<1x128xi1>, vector<1x128xf32>
    %c24 = arith.constant 24 : index
    %105 = memref.load %arg1[%c24] : memref<72xf32, #tpu.memory_space<smem>>
    %c33 = arith.constant 33 : index
    %106 = memref.load %arg1[%c33] : memref<72xf32, #tpu.memory_space<smem>>
    %107 = vector.broadcast %105 : f32 to vector<1x128xf32>
    %108 = vector.broadcast %106 : f32 to vector<1x128xf32>
    %109 = arith.select %20, %107, %108 : vector<1x128xi1>, vector<1x128xf32>
    %c25 = arith.constant 25 : index
    %110 = memref.load %arg1[%c25] : memref<72xf32, #tpu.memory_space<smem>>
    %c34 = arith.constant 34 : index
    %111 = memref.load %arg1[%c34] : memref<72xf32, #tpu.memory_space<smem>>
    %112 = vector.broadcast %110 : f32 to vector<1x128xf32>
    %113 = vector.broadcast %111 : f32 to vector<1x128xf32>
    %114 = arith.select %20, %112, %113 : vector<1x128xi1>, vector<1x128xf32>
    %c26 = arith.constant 26 : index
    %115 = memref.load %arg1[%c26] : memref<72xf32, #tpu.memory_space<smem>>
    %c35 = arith.constant 35 : index
    %116 = memref.load %arg1[%c35] : memref<72xf32, #tpu.memory_space<smem>>
    %117 = vector.broadcast %115 : f32 to vector<1x128xf32>
    %118 = vector.broadcast %116 : f32 to vector<1x128xf32>
    %119 = arith.select %20, %117, %118 : vector<1x128xi1>, vector<1x128xf32>
    %c36 = arith.constant 36 : index
    %120 = memref.load %arg1[%c36] : memref<72xf32, #tpu.memory_space<smem>>
    %c45 = arith.constant 45 : index
    %121 = memref.load %arg1[%c45] : memref<72xf32, #tpu.memory_space<smem>>
    %122 = vector.broadcast %120 : f32 to vector<1x128xf32>
    %123 = vector.broadcast %121 : f32 to vector<1x128xf32>
    %124 = arith.select %20, %122, %123 : vector<1x128xi1>, vector<1x128xf32>
    %c37 = arith.constant 37 : index
    %125 = memref.load %arg1[%c37] : memref<72xf32, #tpu.memory_space<smem>>
    %c46 = arith.constant 46 : index
    %126 = memref.load %arg1[%c46] : memref<72xf32, #tpu.memory_space<smem>>
    %127 = vector.broadcast %125 : f32 to vector<1x128xf32>
    %128 = vector.broadcast %126 : f32 to vector<1x128xf32>
    %129 = arith.select %20, %127, %128 : vector<1x128xi1>, vector<1x128xf32>
    %c38 = arith.constant 38 : index
    %130 = memref.load %arg1[%c38] : memref<72xf32, #tpu.memory_space<smem>>
    %c47 = arith.constant 47 : index
    %131 = memref.load %arg1[%c47] : memref<72xf32, #tpu.memory_space<smem>>
    %132 = vector.broadcast %130 : f32 to vector<1x128xf32>
    %133 = vector.broadcast %131 : f32 to vector<1x128xf32>
    %134 = arith.select %20, %132, %133 : vector<1x128xi1>, vector<1x128xf32>
    %c39 = arith.constant 39 : index
    %135 = memref.load %arg1[%c39] : memref<72xf32, #tpu.memory_space<smem>>
    %c48 = arith.constant 48 : index
    %136 = memref.load %arg1[%c48] : memref<72xf32, #tpu.memory_space<smem>>
    %137 = vector.broadcast %135 : f32 to vector<1x128xf32>
    %138 = vector.broadcast %136 : f32 to vector<1x128xf32>
    %139 = arith.select %20, %137, %138 : vector<1x128xi1>, vector<1x128xf32>
    %c40 = arith.constant 40 : index
    %140 = memref.load %arg1[%c40] : memref<72xf32, #tpu.memory_space<smem>>
    %c49 = arith.constant 49 : index
    %141 = memref.load %arg1[%c49] : memref<72xf32, #tpu.memory_space<smem>>
    %142 = vector.broadcast %140 : f32 to vector<1x128xf32>
    %143 = vector.broadcast %141 : f32 to vector<1x128xf32>
    %144 = arith.select %20, %142, %143 : vector<1x128xi1>, vector<1x128xf32>
    %c41 = arith.constant 41 : index
    %145 = memref.load %arg1[%c41] : memref<72xf32, #tpu.memory_space<smem>>
    %c50 = arith.constant 50 : index
    %146 = memref.load %arg1[%c50] : memref<72xf32, #tpu.memory_space<smem>>
    %147 = vector.broadcast %145 : f32 to vector<1x128xf32>
    %148 = vector.broadcast %146 : f32 to vector<1x128xf32>
    %149 = arith.select %20, %147, %148 : vector<1x128xi1>, vector<1x128xf32>
    %c42 = arith.constant 42 : index
    %150 = memref.load %arg1[%c42] : memref<72xf32, #tpu.memory_space<smem>>
    %c51 = arith.constant 51 : index
    %151 = memref.load %arg1[%c51] : memref<72xf32, #tpu.memory_space<smem>>
    %152 = vector.broadcast %150 : f32 to vector<1x128xf32>
    %153 = vector.broadcast %151 : f32 to vector<1x128xf32>
    %154 = arith.select %20, %152, %153 : vector<1x128xi1>, vector<1x128xf32>
    %c43 = arith.constant 43 : index
    %155 = memref.load %arg1[%c43] : memref<72xf32, #tpu.memory_space<smem>>
    %c52 = arith.constant 52 : index
    %156 = memref.load %arg1[%c52] : memref<72xf32, #tpu.memory_space<smem>>
    %157 = vector.broadcast %155 : f32 to vector<1x128xf32>
    %158 = vector.broadcast %156 : f32 to vector<1x128xf32>
    %159 = arith.select %20, %157, %158 : vector<1x128xi1>, vector<1x128xf32>
    %c44 = arith.constant 44 : index
    %160 = memref.load %arg1[%c44] : memref<72xf32, #tpu.memory_space<smem>>
    %c53 = arith.constant 53 : index
    %161 = memref.load %arg1[%c53] : memref<72xf32, #tpu.memory_space<smem>>
    %162 = vector.broadcast %160 : f32 to vector<1x128xf32>
    %163 = vector.broadcast %161 : f32 to vector<1x128xf32>
    %164 = arith.select %20, %162, %163 : vector<1x128xi1>, vector<1x128xf32>
    %c54 = arith.constant 54 : index
    %165 = memref.load %arg1[%c54] : memref<72xf32, #tpu.memory_space<smem>>
    %c63 = arith.constant 63 : index
    %166 = memref.load %arg1[%c63] : memref<72xf32, #tpu.memory_space<smem>>
    %167 = vector.broadcast %165 : f32 to vector<1x128xf32>
    %168 = vector.broadcast %166 : f32 to vector<1x128xf32>
    %169 = arith.select %20, %167, %168 : vector<1x128xi1>, vector<1x128xf32>
    %c55 = arith.constant 55 : index
    %170 = memref.load %arg1[%c55] : memref<72xf32, #tpu.memory_space<smem>>
    %c64 = arith.constant 64 : index
    %171 = memref.load %arg1[%c64] : memref<72xf32, #tpu.memory_space<smem>>
    %172 = vector.broadcast %170 : f32 to vector<1x128xf32>
    %173 = vector.broadcast %171 : f32 to vector<1x128xf32>
    %174 = arith.select %20, %172, %173 : vector<1x128xi1>, vector<1x128xf32>
    %c56 = arith.constant 56 : index
    %175 = memref.load %arg1[%c56] : memref<72xf32, #tpu.memory_space<smem>>
    %c65 = arith.constant 65 : index
    %176 = memref.load %arg1[%c65] : memref<72xf32, #tpu.memory_space<smem>>
    %177 = vector.broadcast %175 : f32 to vector<1x128xf32>
    %178 = vector.broadcast %176 : f32 to vector<1x128xf32>
    %179 = arith.select %20, %177, %178 : vector<1x128xi1>, vector<1x128xf32>
    %c57 = arith.constant 57 : index
    %180 = memref.load %arg1[%c57] : memref<72xf32, #tpu.memory_space<smem>>
    %c66 = arith.constant 66 : index
    %181 = memref.load %arg1[%c66] : memref<72xf32, #tpu.memory_space<smem>>
    %182 = vector.broadcast %180 : f32 to vector<1x128xf32>
    %183 = vector.broadcast %181 : f32 to vector<1x128xf32>
    %184 = arith.select %20, %182, %183 : vector<1x128xi1>, vector<1x128xf32>
    %c58 = arith.constant 58 : index
    %185 = memref.load %arg1[%c58] : memref<72xf32, #tpu.memory_space<smem>>
    %c67 = arith.constant 67 : index
    %186 = memref.load %arg1[%c67] : memref<72xf32, #tpu.memory_space<smem>>
    %187 = vector.broadcast %185 : f32 to vector<1x128xf32>
    %188 = vector.broadcast %186 : f32 to vector<1x128xf32>
    %189 = arith.select %20, %187, %188 : vector<1x128xi1>, vector<1x128xf32>
    %c59 = arith.constant 59 : index
    %190 = memref.load %arg1[%c59] : memref<72xf32, #tpu.memory_space<smem>>
    %c68 = arith.constant 68 : index
    %191 = memref.load %arg1[%c68] : memref<72xf32, #tpu.memory_space<smem>>
    %192 = vector.broadcast %190 : f32 to vector<1x128xf32>
    %193 = vector.broadcast %191 : f32 to vector<1x128xf32>
    %194 = arith.select %20, %192, %193 : vector<1x128xi1>, vector<1x128xf32>
    %c60 = arith.constant 60 : index
    %195 = memref.load %arg1[%c60] : memref<72xf32, #tpu.memory_space<smem>>
    %c69 = arith.constant 69 : index
    %196 = memref.load %arg1[%c69] : memref<72xf32, #tpu.memory_space<smem>>
    %197 = vector.broadcast %195 : f32 to vector<1x128xf32>
    %198 = vector.broadcast %196 : f32 to vector<1x128xf32>
    %199 = arith.select %20, %197, %198 : vector<1x128xi1>, vector<1x128xf32>
    %c61 = arith.constant 61 : index
    %200 = memref.load %arg1[%c61] : memref<72xf32, #tpu.memory_space<smem>>
    %c70 = arith.constant 70 : index
    %201 = memref.load %arg1[%c70] : memref<72xf32, #tpu.memory_space<smem>>
    %202 = vector.broadcast %200 : f32 to vector<1x128xf32>
    %203 = vector.broadcast %201 : f32 to vector<1x128xf32>
    %204 = arith.select %20, %202, %203 : vector<1x128xi1>, vector<1x128xf32>
    %c62 = arith.constant 62 : index
    %205 = memref.load %arg1[%c62] : memref<72xf32, #tpu.memory_space<smem>>
    %c71 = arith.constant 71 : index
    %206 = memref.load %arg1[%c71] : memref<72xf32, #tpu.memory_space<smem>>
    %207 = vector.broadcast %205 : f32 to vector<1x128xf32>
    %208 = vector.broadcast %206 : f32 to vector<1x128xf32>
    %209 = arith.select %20, %207, %208 : vector<1x128xi1>, vector<1x128xf32>
    %c0_9 = arith.constant 0 : index
    %210 = memref.load %arg2[%c0_9] : memref<8xf32, #tpu.memory_space<smem>>
    %c1_10 = arith.constant 1 : index
    %211 = memref.load %arg2[%c1_10] : memref<8xf32, #tpu.memory_space<smem>>
    %212 = vector.broadcast %210 : f32 to vector<1x128xf32>
    %213 = vector.broadcast %211 : f32 to vector<1x128xf32>
    %214 = arith.select %20, %212, %213 : vector<1x128xi1>, vector<1x128xf32>
    %c2_11 = arith.constant 2 : index
    %215 = memref.load %arg2[%c2_11] : memref<8xf32, #tpu.memory_space<smem>>
    %c3_12 = arith.constant 3 : index
    %216 = memref.load %arg2[%c3_12] : memref<8xf32, #tpu.memory_space<smem>>
    %217 = vector.broadcast %215 : f32 to vector<1x128xf32>
    %218 = vector.broadcast %216 : f32 to vector<1x128xf32>
    %219 = arith.select %20, %217, %218 : vector<1x128xi1>, vector<1x128xf32>
    %c4_13 = arith.constant 4 : index
    %220 = memref.load %arg2[%c4_13] : memref<8xf32, #tpu.memory_space<smem>>
    %c5_14 = arith.constant 5 : index
    %221 = memref.load %arg2[%c5_14] : memref<8xf32, #tpu.memory_space<smem>>
    %222 = vector.broadcast %220 : f32 to vector<1x128xf32>
    %223 = vector.broadcast %221 : f32 to vector<1x128xf32>
    %224 = arith.select %20, %222, %223 : vector<1x128xi1>, vector<1x128xf32>
    %c6_15 = arith.constant 6 : index
    %225 = memref.load %arg2[%c6_15] : memref<8xf32, #tpu.memory_space<smem>>
    %c7_16 = arith.constant 7 : index
    %226 = memref.load %arg2[%c7_16] : memref<8xf32, #tpu.memory_space<smem>>
    %227 = vector.broadcast %225 : f32 to vector<1x128xf32>
    %228 = vector.broadcast %226 : f32 to vector<1x128xf32>
    %229 = arith.select %20, %227, %228 : vector<1x128xi1>, vector<1x128xf32>
    %cst = arith.constant 0.000000e+00 : f32
    %230 = vector.broadcast %cst : f32 to vector<64x128xf32>
    %cst_17 = arith.constant 0.000000e+00 : f32
    %231 = vector.broadcast %cst_17 : f32 to vector<64x128xf32>
    %cst_18 = arith.constant 0.000000e+00 : f32
    %232 = vector.broadcast %cst_18 : f32 to vector<64x128xf32>
    %cst_19 = arith.constant 0.000000e+00 : f32
    %233 = vector.broadcast %cst_19 : f32 to vector<64x128xf32>
    %c1_i32_20 = arith.constant 1 : i32
    %234 = tpu.dynamic_rotate %1 by %c1_i32_20 dim 0 : vector<64x128xf32>, i32 -> vector<64x128xf32>
    %cst_21 = arith.constant 0.000000e+00 : f32
    %235 = vector.shape_cast %27 : vector<64x1xi1> to vector<64x1xi1>
    %236 = vector.broadcast %235 : vector<64x1xi1> to vector<64x128xi1>
    %237 = vector.broadcast %cst_21 : f32 to vector<64x128xf32>
    %238 = arith.select %236, %234, %237 : vector<64x128xi1>, vector<64x128xf32>
    %c1_i32_22 = arith.constant 1 : i32
    %239 = tpu.dynamic_rotate %238 by %c1_i32_22 dim 1 : vector<64x128xf32>, i32 -> vector<64x128xf32>
    %cst_23 = arith.constant 0.000000e+00 : f32
    %240 = vector.shape_cast %22 : vector<1x128xi1> to vector<1x128xi1>
    %241 = vector.broadcast %240 : vector<1x128xi1> to vector<64x128xi1>
    %242 = vector.broadcast %cst_23 : f32 to vector<64x128xf32>
    %243 = arith.select %241, %239, %242 : vector<64x128xi1>, vector<64x128xf32>
    %244 = vector.broadcast %34 : vector<1x128xf32> to vector<64x128xf32>
    %245 = arith.mulf %244, %243 : vector<64x128xf32>
    %246 = arith.addf %230, %245 : vector<64x128xf32>
    %247 = vector.broadcast %79 : vector<1x128xf32> to vector<64x128xf32>
    %248 = arith.mulf %247, %243 : vector<64x128xf32>
    %249 = arith.addf %231, %248 : vector<64x128xf32>
    %250 = vector.broadcast %124 : vector<1x128xf32> to vector<64x128xf32>
    %251 = arith.mulf %250, %243 : vector<64x128xf32>
    %252 = arith.addf %232, %251 : vector<64x128xf32>
    %253 = vector.broadcast %169 : vector<1x128xf32> to vector<64x128xf32>
    %254 = arith.mulf %253, %243 : vector<64x128xf32>
    %255 = arith.addf %233, %254 : vector<64x128xf32>
    %256 = vector.broadcast %39 : vector<1x128xf32> to vector<64x128xf32>
    %257 = arith.mulf %256, %238 : vector<64x128xf32>
    %258 = arith.addf %246, %257 : vector<64x128xf32>
    %259 = vector.broadcast %84 : vector<1x128xf32> to vector<64x128xf32>
    %260 = arith.mulf %259, %238 : vector<64x128xf32>
    %261 = arith.addf %249, %260 : vector<64x128xf32>
    %262 = vector.broadcast %129 : vector<1x128xf32> to vector<64x128xf32>
    %263 = arith.mulf %262, %238 : vector<64x128xf32>
    %264 = arith.addf %252, %263 : vector<64x128xf32>
    %265 = vector.broadcast %174 : vector<1x128xf32> to vector<64x128xf32>
    %266 = arith.mulf %265, %238 : vector<64x128xf32>
    %267 = arith.addf %255, %266 : vector<64x128xf32>
    %c127_i32 = arith.constant 127 : i32
    %268 = tpu.dynamic_rotate %238 by %c127_i32 dim 1 : vector<64x128xf32>, i32 -> vector<64x128xf32>
    %cst_24 = arith.constant 0.000000e+00 : f32
    %269 = vector.shape_cast %24 : vector<1x128xi1> to vector<1x128xi1>
    %270 = vector.broadcast %269 : vector<1x128xi1> to vector<64x128xi1>
    %271 = vector.broadcast %cst_24 : f32 to vector<64x128xf32>
    %272 = arith.select %270, %268, %271 : vector<64x128xi1>, vector<64x128xf32>
    %273 = vector.broadcast %44 : vector<1x128xf32> to vector<64x128xf32>
    %274 = arith.mulf %273, %272 : vector<64x128xf32>
    %275 = arith.addf %258, %274 : vector<64x128xf32>
    %276 = vector.broadcast %89 : vector<1x128xf32> to vector<64x128xf32>
    %277 = arith.mulf %276, %272 : vector<64x128xf32>
    %278 = arith.addf %261, %277 : vector<64x128xf32>
    %279 = vector.broadcast %134 : vector<1x128xf32> to vector<64x128xf32>
    %280 = arith.mulf %279, %272 : vector<64x128xf32>
    %281 = arith.addf %264, %280 : vector<64x128xf32>
    %282 = vector.broadcast %179 : vector<1x128xf32> to vector<64x128xf32>
    %283 = arith.mulf %282, %272 : vector<64x128xf32>
    %284 = arith.addf %267, %283 : vector<64x128xf32>
    %c1_i32_25 = arith.constant 1 : i32
    %285 = tpu.dynamic_rotate %1 by %c1_i32_25 dim 1 : vector<64x128xf32>, i32 -> vector<64x128xf32>
    %cst_26 = arith.constant 0.000000e+00 : f32
    %286 = vector.shape_cast %22 : vector<1x128xi1> to vector<1x128xi1>
    %287 = vector.broadcast %286 : vector<1x128xi1> to vector<64x128xi1>
    %288 = vector.broadcast %cst_26 : f32 to vector<64x128xf32>
    %289 = arith.select %287, %285, %288 : vector<64x128xi1>, vector<64x128xf32>
    %290 = vector.broadcast %49 : vector<1x128xf32> to vector<64x128xf32>
    %291 = arith.mulf %290, %289 : vector<64x128xf32>
    %292 = arith.addf %275, %291 : vector<64x128xf32>
    %293 = vector.broadcast %94 : vector<1x128xf32> to vector<64x128xf32>
    %294 = arith.mulf %293, %289 : vector<64x128xf32>
    %295 = arith.addf %278, %294 : vector<64x128xf32>
    %296 = vector.broadcast %139 : vector<1x128xf32> to vector<64x128xf32>
    %297 = arith.mulf %296, %289 : vector<64x128xf32>
    %298 = arith.addf %281, %297 : vector<64x128xf32>
    %299 = vector.broadcast %184 : vector<1x128xf32> to vector<64x128xf32>
    %300 = arith.mulf %299, %289 : vector<64x128xf32>
    %301 = arith.addf %284, %300 : vector<64x128xf32>
    %302 = vector.broadcast %54 : vector<1x128xf32> to vector<64x128xf32>
    %303 = arith.mulf %302, %1 : vector<64x128xf32>
    %304 = arith.addf %292, %303 : vector<64x128xf32>
    %305 = vector.broadcast %99 : vector<1x128xf32> to vector<64x128xf32>
    %306 = arith.mulf %305, %1 : vector<64x128xf32>
    %307 = arith.addf %295, %306 : vector<64x128xf32>
    %308 = vector.broadcast %144 : vector<1x128xf32> to vector<64x128xf32>
    %309 = arith.mulf %308, %1 : vector<64x128xf32>
    %310 = arith.addf %298, %309 : vector<64x128xf32>
    %311 = vector.broadcast %189 : vector<1x128xf32> to vector<64x128xf32>
    %312 = arith.mulf %311, %1 : vector<64x128xf32>
    %313 = arith.addf %301, %312 : vector<64x128xf32>
    %c127_i32_27 = arith.constant 127 : i32
    %314 = tpu.dynamic_rotate %1 by %c127_i32_27 dim 1 : vector<64x128xf32>, i32 -> vector<64x128xf32>
    %cst_28 = arith.constant 0.000000e+00 : f32
    %315 = vector.shape_cast %24 : vector<1x128xi1> to vector<1x128xi1>
    %316 = vector.broadcast %315 : vector<1x128xi1> to vector<64x128xi1>
    %317 = vector.broadcast %cst_28 : f32 to vector<64x128xf32>
    %318 = arith.select %316, %314, %317 : vector<64x128xi1>, vector<64x128xf32>
    %319 = vector.broadcast %59 : vector<1x128xf32> to vector<64x128xf32>
    %320 = arith.mulf %319, %318 : vector<64x128xf32>
    %321 = arith.addf %304, %320 : vector<64x128xf32>
    %322 = vector.broadcast %104 : vector<1x128xf32> to vector<64x128xf32>
    %323 = arith.mulf %322, %318 : vector<64x128xf32>
    %324 = arith.addf %307, %323 : vector<64x128xf32>
    %325 = vector.broadcast %149 : vector<1x128xf32> to vector<64x128xf32>
    %326 = arith.mulf %325, %318 : vector<64x128xf32>
    %327 = arith.addf %310, %326 : vector<64x128xf32>
    %328 = vector.broadcast %194 : vector<1x128xf32> to vector<64x128xf32>
    %329 = arith.mulf %328, %318 : vector<64x128xf32>
    %330 = arith.addf %313, %329 : vector<64x128xf32>
    %c63_i32 = arith.constant 63 : i32
    %331 = tpu.dynamic_rotate %1 by %c63_i32 dim 0 : vector<64x128xf32>, i32 -> vector<64x128xf32>
    %cst_29 = arith.constant 0.000000e+00 : f32
    %332 = vector.shape_cast %29 : vector<64x1xi1> to vector<64x1xi1>
    %333 = vector.broadcast %332 : vector<64x1xi1> to vector<64x128xi1>
    %334 = vector.broadcast %cst_29 : f32 to vector<64x128xf32>
    %335 = arith.select %333, %331, %334 : vector<64x128xi1>, vector<64x128xf32>
    %c1_i32_30 = arith.constant 1 : i32
    %336 = tpu.dynamic_rotate %335 by %c1_i32_30 dim 1 : vector<64x128xf32>, i32 -> vector<64x128xf32>
    %cst_31 = arith.constant 0.000000e+00 : f32
    %337 = vector.shape_cast %22 : vector<1x128xi1> to vector<1x128xi1>
    %338 = vector.broadcast %337 : vector<1x128xi1> to vector<64x128xi1>
    %339 = vector.broadcast %cst_31 : f32 to vector<64x128xf32>
    %340 = arith.select %338, %336, %339 : vector<64x128xi1>, vector<64x128xf32>
    %341 = vector.broadcast %64 : vector<1x128xf32> to vector<64x128xf32>
    %342 = arith.mulf %341, %340 : vector<64x128xf32>
    %343 = arith.addf %321, %342 : vector<64x128xf32>
    %344 = vector.broadcast %109 : vector<1x128xf32> to vector<64x128xf32>
    %345 = arith.mulf %344, %340 : vector<64x128xf32>
    %346 = arith.addf %324, %345 : vector<64x128xf32>
    %347 = vector.broadcast %154 : vector<1x128xf32> to vector<64x128xf32>
    %348 = arith.mulf %347, %340 : vector<64x128xf32>
    %349 = arith.addf %327, %348 : vector<64x128xf32>
    %350 = vector.broadcast %199 : vector<1x128xf32> to vector<64x128xf32>
    %351 = arith.mulf %350, %340 : vector<64x128xf32>
    %352 = arith.addf %330, %351 : vector<64x128xf32>
    %353 = vector.broadcast %69 : vector<1x128xf32> to vector<64x128xf32>
    %354 = arith.mulf %353, %335 : vector<64x128xf32>
    %355 = arith.addf %343, %354 : vector<64x128xf32>
    %356 = vector.broadcast %114 : vector<1x128xf32> to vector<64x128xf32>
    %357 = arith.mulf %356, %335 : vector<64x128xf32>
    %358 = arith.addf %346, %357 : vector<64x128xf32>
    %359 = vector.broadcast %159 : vector<1x128xf32> to vector<64x128xf32>
    %360 = arith.mulf %359, %335 : vector<64x128xf32>
    %361 = arith.addf %349, %360 : vector<64x128xf32>
    %362 = vector.broadcast %204 : vector<1x128xf32> to vector<64x128xf32>
    %363 = arith.mulf %362, %335 : vector<64x128xf32>
    %364 = arith.addf %352, %363 : vector<64x128xf32>
    %c127_i32_32 = arith.constant 127 : i32
    %365 = tpu.dynamic_rotate %335 by %c127_i32_32 dim 1 : vector<64x128xf32>, i32 -> vector<64x128xf32>
    %cst_33 = arith.constant 0.000000e+00 : f32
    %366 = vector.shape_cast %24 : vector<1x128xi1> to vector<1x128xi1>
    %367 = vector.broadcast %366 : vector<1x128xi1> to vector<64x128xi1>
    %368 = vector.broadcast %cst_33 : f32 to vector<64x128xf32>
    %369 = arith.select %367, %365, %368 : vector<64x128xi1>, vector<64x128xf32>
    %370 = vector.broadcast %74 : vector<1x128xf32> to vector<64x128xf32>
    %371 = arith.mulf %370, %369 : vector<64x128xf32>
    %372 = arith.addf %355, %371 : vector<64x128xf32>
    %373 = vector.broadcast %119 : vector<1x128xf32> to vector<64x128xf32>
    %374 = arith.mulf %373, %369 : vector<64x128xf32>
    %375 = arith.addf %358, %374 : vector<64x128xf32>
    %376 = vector.broadcast %164 : vector<1x128xf32> to vector<64x128xf32>
    %377 = arith.mulf %376, %369 : vector<64x128xf32>
    %378 = arith.addf %361, %377 : vector<64x128xf32>
    %379 = vector.broadcast %209 : vector<1x128xf32> to vector<64x128xf32>
    %380 = arith.mulf %379, %369 : vector<64x128xf32>
    %381 = arith.addf %364, %380 : vector<64x128xf32>
    %382 = vector.broadcast %214 : vector<1x128xf32> to vector<64x128xf32>
    %383 = arith.addf %372, %382 : vector<64x128xf32>
    %c0_34 = arith.constant 0 : index
    %c0_35 = arith.constant 0 : index
    %c0_36 = arith.constant 0 : index
    %384 = vector.load %arg3[%c0_34, %c0_35, %c0_36] : memref<4x64x128xf32, #tpu.memory_space<vmem>>, vector<1x64x128xf32>
    %385 = vector.shape_cast %384 : vector<1x64x128xf32> to vector<64x128xf32>
    %386 = vector.shape_cast %383 : vector<64x128xf32> to vector<1x64x128xf32>
    tpu.vector_store %arg3[%c0_34, %c0_35, %c0_36], %386 {strides = array<i32>} : memref<4x64x128xf32, #tpu.memory_space<vmem>>, vector<1x64x128xf32>,
    %387 = vector.broadcast %219 : vector<1x128xf32> to vector<64x128xf32>
    %388 = arith.addf %375, %387 : vector<64x128xf32>
    %c1_37 = arith.constant 1 : index
    %c0_38 = arith.constant 0 : index
    %c0_39 = arith.constant 0 : index
    %389 = vector.load %arg3[%c1_37, %c0_38, %c0_39] : memref<4x64x128xf32, #tpu.memory_space<vmem>>, vector<1x64x128xf32>
    %390 = vector.shape_cast %389 : vector<1x64x128xf32> to vector<64x128xf32>
    %391 = vector.shape_cast %388 : vector<64x128xf32> to vector<1x64x128xf32>
    tpu.vector_store %arg3[%c1_37, %c0_38, %c0_39], %391 {strides = array<i32>} : memref<4x64x128xf32, #tpu.memory_space<vmem>>, vector<1x64x128xf32>,
    %392 = vector.broadcast %224 : vector<1x128xf32> to vector<64x128xf32>
    %393 = arith.addf %378, %392 : vector<64x128xf32>
    %c2_40 = arith.constant 2 : index
    %c0_41 = arith.constant 0 : index
    %c0_42 = arith.constant 0 : index
    %394 = vector.load %arg3[%c2_40, %c0_41, %c0_42] : memref<4x64x128xf32, #tpu.memory_space<vmem>>, vector<1x64x128xf32>
    %395 = vector.shape_cast %394 : vector<1x64x128xf32> to vector<64x128xf32>
    %396 = vector.shape_cast %393 : vector<64x128xf32> to vector<1x64x128xf32>
    tpu.vector_store %arg3[%c2_40, %c0_41, %c0_42], %396 {strides = array<i32>} : memref<4x64x128xf32, #tpu.memory_space<vmem>>, vector<1x64x128xf32>,
    %397 = vector.broadcast %229 : vector<1x128xf32> to vector<64x128xf32>
    %398 = arith.addf %381, %397 : vector<64x128xf32>
    %c3_43 = arith.constant 3 : index
    %c0_44 = arith.constant 0 : index
    %c0_45 = arith.constant 0 : index
    %399 = vector.load %arg3[%c3_43, %c0_44, %c0_45] : memref<4x64x128xf32, #tpu.memory_space<vmem>>, vector<1x64x128xf32>
    %400 = vector.shape_cast %399 : vector<1x64x128xf32> to vector<64x128xf32>
    %401 = vector.shape_cast %398 : vector<64x128xf32> to vector<1x64x128xf32>
    tpu.vector_store %arg3[%c3_43, %c0_44, %c0_45], %401 {strides = array<i32>} : memref<4x64x128xf32, #tpu.memory_space<vmem>>, vector<1x64x128xf32>,
    return
  }
}

</mosaic_0001>

<llo_original>
// kernel: tpu_custom_call.1
$region0: #{tpu_custom_call.1}
  #allocation0 [shape = 'u32[]', space=smem, size = 0x4, offset = 0x4, fixed_abs, tag = 'smem constant byte address 0x4 - core index']
  #allocation1 [shape = 'u32[144,128]{1,0:T(1,128)}', space=vmem, size = 0x12000, scoped, tag = 'internal scratch']
  %s0 = inlined_call_operand.hbm [shape: f32[64,64], index: 0, kind: input, shape index: {}]
  %s1 = inlined_call_operand.vmem [shape: f32[72], index: 1, kind: input, shape index: {}]
  %s2 = inlined_call_operand.vmem [shape: f32[8], index: 2, kind: input, shape index: {}]
  %s3 = inlined_call_operand.hbm [shape: f32[4,64,128], index: 3, kind: output, shape index: {}]
  %s4 = sld [smem:[#allocation0]]
  $region34: #{tpu_custom_call.1} parent=0
    _
  %s6 = ssub.s32 1, %s4
  %s7 = scalar_select 0, %s6, %s4
  $region1: #{tpu_custom_call.1} parent=0
    #allocation2 [shape = 'u8[32768]{0}', space=vmem, size = 0x8000, scoped, tag = 'input window, operand 0, single buffered']
    #allocation3 [shape = 's32[1]{0}', space=sflag, size = 0x4, scoped, tag = 'scoped memory for tpu_custom_call.1']
    #allocation4 [shape = 's32[1]{0}', space=sflag, size = 0x4, scoped, tag = 'scoped memory for tpu_custom_call.1']
    #allocation5 [shape = 's32[1]{0}', space=sflag, size = 0x4, scoped, tag = 'scoped memory for tpu_custom_call.1']
    #allocation6 [shape = 'u8[512]{0}', space=smem, size = 0x200, scoped, tag = 'input window, operand 1, single buffered']
    #allocation7 [shape = 'u8[512]{0}', space=smem, size = 0x200, scoped, tag = 'input window, operand 2, single buffered']
    #allocation8 [shape = 's32[1]{0}', space=sflag, size = 0x4, scoped, tag = 'scoped memory for tpu_custom_call.1']
    #allocation9 [shape = 'u8[131072]{0}', space=vmem, size = 0x20000, scoped, tag = 'output window, operand 0, single buffered']
    %8 = vsyncpa [#allocation3], 0
    %9 = vsyncpa [#allocation5], 0
    %10 = vsyncpa [#allocation8], 0
    %11 = vsyncpa [#allocation4], 0
    // Predicated region
    $region2: #{tpu_custom_call.1} parent=1 // pred_check
      _
    $region3: #{tpu_custom_call.1} parent=1 // pred_check_branch
      %13 = sbr.rel (0) target = $region5
    $region4: #{tpu_custom_call.1} parent=1 // pred_region
      %s15 = ssub.s32 1024, 1024
      %16 = vsyncadd [#allocation3], %s15
      %s17 = sshll.u32 [#allocation2], 4
      %s18 = int_to_ptr.vmem [resolvable:$true] %s17
      %23 = dma.hbm_to_vmem [thread:$0]  %s0, 1024, %s18, [#allocation3], 128, 128, 8
    $region5: #{tpu_custom_call.1} parent=1 // pred_fallthru
      _
    // Predicated region
    $region6: #{tpu_custom_call.1} parent=1 // pred_check
      _
    $region7: #{tpu_custom_call.1} parent=1 // pred_check_branch
      %25 = sbr.rel (0) target = $region9
    $region8: #{tpu_custom_call.1} parent=1 // pred_region
      %s27 = ssub.s32 16, 16
      %28 = vsyncadd [#allocation5], %s27
      %s30 = sshll.u32 %s1, 4
      %s31 = int_to_ptr.vmem [resolvable:$true] %s30
      %33 = dma.vmem_to_smem %s31, 16, [#allocation6], [#allocation5]
    $region9: #{tpu_custom_call.1} parent=1 // pred_fallthru
      _
    // Predicated region
    $region10: #{tpu_custom_call.1} parent=1 // pred_check
      _
    $region11: #{tpu_custom_call.1} parent=1 // pred_check_branch
      %35 = sbr.rel (0) target = $region13
    $region12: #{tpu_custom_call.1} parent=1 // pred_region
      %s37 = ssub.s32 16, 16
      %38 = vsyncadd [#allocation8], %s37
      %s40 = sshll.u32 %s2, 4
      %s41 = int_to_ptr.vmem [resolvable:$true] %s40
      %43 = dma.vmem_to_smem %s41, 16, [#allocation7], [#allocation8]
    $region13: #{tpu_custom_call.1} parent=1 // pred_fallthru
      _
    // Predicated region
    $region14: #{tpu_custom_call.1} parent=1 // pred_check
      _
    $region15: #{tpu_custom_call.1} parent=1 // pred_check_branch
      %45 = sbr.rel (0) target = $region17
    $region16: #{tpu_custom_call.1} parent=1 // pred_region
      %46 = dma.done [#allocation3], 1024
    $region17: #{tpu_custom_call.1} parent=1 // pred_fallthru
      _
    // Predicated region
    $region18: #{tpu_custom_call.1} parent=1 // pred_check
      _
    $region19: #{tpu_custom_call.1} parent=1 // pred_check_branch
      %48 = sbr.rel (0) target = $region21
    $region20: #{tpu_custom_call.1} parent=1 // pred_region
      %49 = dma.done [#allocation5], 16
    $region21: #{tpu_custom_call.1} parent=1 // pred_fallthru
      _
    // Predicated region
    $region22: #{tpu_custom_call.1} parent=1 // pred_check
      _
    $region23: #{tpu_custom_call.1} parent=1 // pred_check_branch
      %51 = sbr.rel (0) target = $region25
    $region24: #{tpu_custom_call.1} parent=1 // pred_region
      %52 = dma.done [#allocation8], 16
    $region25: #{tpu_custom_call.1} parent=1 // pred_fallthru
      _
    %53 = sfence
    %v54 = vld [vmem:[#allocation2] sm:$0xff]
    %v55 = vld [vmem:[#allocation2 + $0x8] sm:$0xff]
    %v56 = vld [vmem:[#allocation2 + $0x10] sm:$0xff]
    %v57 = vld [vmem:[#allocation2 + $0x18] sm:$0xff]
    %v58 = vld [vmem:[#allocation2 + $0x20] sm:$0xff]
    %v59 = vld [vmem:[#allocation2 + $0x28] sm:$0xff]
    %v60 = vld [vmem:[#allocation2 + $0x30] sm:$0xff]
    %v61 = vld [vmem:[#allocation2 + $0x38] sm:$0xff]
    %70 = vrot.lane.b32.xlu0 %v54, 64
    %v71 = vpop.permute.xlu0 %70
    %72 = vrot.lane.b32.xlu0 %v55, 64
    %v73 = vpop.permute.xlu0 %72
    %74 = vrot.lane.b32.xlu0 %v56, 64
    %v75 = vpop.permute.xlu0 %74
    %76 = vrot.lane.b32.xlu0 %v57, 64
    %v77 = vpop.permute.xlu0 %76
    %78 = vrot.lane.b32.xlu0 %v58, 64
    %v79 = vpop.permute.xlu0 %78
    %80 = vrot.lane.b32.xlu0 %v59, 64
    %v81 = vpop.permute.xlu0 %80
    %82 = vrot.lane.b32.xlu0 %v60, 64
    %v83 = vpop.permute.xlu0 %82
    %84 = vrot.lane.b32.xlu0 %v61, 64
    %v85 = vpop.permute.xlu0 %84
    %vm94 = vcmask 523264
    %v95 = vsel %vm94, %v54, %v71
    %v96 = vsel %vm94, %v55, %v73
    %v97 = vsel %vm94, %v56, %v75
    %v98 = vsel %vm94, %v57, %v77
    %v99 = vsel %vm94, %v58, %v79
    %v100 = vsel %vm94, %v59, %v81
    %v101 = vsel %vm94, %v60, %v83
    %v102 = vsel %vm94, %v61, %v85
    %v103 = vlaneseq
    %v104 = vand.u32 %v103, 127
    %vm105 = vcmp.lt.s32.totalorder %v104, 0
    %v106 = vsub.s32 0, %v104
    %v107 = vsel %vm105, %v106, %v104
    %v108 = vshrl.u32 %v107, 6
    %v109 = vand.u32 %v107, 63
    %v110 = vsub.s32 0, %v109
    %v111 = vsel %vm105, %v110, %v109
    %vm112 = vcmp.ne.s32.totalorder %v111, 0
    %vm113 = vcmp.lt.s32.totalorder %v111, 0
    %vm114 = vmand %vm113, %vm112
    %v115 = vadd.s32 %v111, 64
    %v116 = vsel %vm114, %v115, %v111
    %vm117 = vcmp.lt.s32.totalorder %v104, 64
    %vm118 = vcmp.ge.s32.totalorder %v116, 1
    %vm119 = vcmp.le.s32.totalorder %v116, 62
    %v120 = vlaneseq
    %v121 = vshrl.u32 %v120, 7
    %v122 = vadd.s32 %v121, 8
    %v123 = vadd.s32 %v121, 16
    %v124 = vadd.s32 %v121, 24
    %v125 = vadd.s32 %v121, 32
    %v126 = vadd.s32 %v121, 40
    %v127 = vadd.s32 %v121, 48
    %v128 = vadd.s32 %v121, 56
    %vm129 = vcmp.ge.s32.totalorder %v121, 1
    %vm130 = vcmp.ge.s32.totalorder %v122, 1
    %vm131 = vcmp.ge.s32.totalorder %v123, 1
    %vm132 = vcmp.ge.s32.totalorder %v124, 1
    %vm133 = vcmp.ge.s32.totalorder %v125, 1
    %vm134 = vcmp.ge.s32.totalorder %v126, 1
    %vm135 = vcmp.ge.s32.totalorder %v127, 1
    %vm136 = vcmp.ge.s32.totalorder %v128, 1
    %vm137 = vcmp.le.s32.totalorder %v121, 62
    %vm138 = vcmp.le.s32.totalorder %v122, 62
    %vm139 = vcmp.le.s32.totalorder %v123, 62
    %vm140 = vcmp.le.s32.totalorder %v124, 62
    %vm141 = vcmp.le.s32.totalorder %v125, 62
    %vm142 = vcmp.le.s32.totalorder %v126, 62
    %vm143 = vcmp.le.s32.totalorder %v127, 62
    %vm144 = vcmp.le.s32.totalorder %v128, 62
    %s145 = sld [smem:[#allocation6]]
    %s146 = sld [smem:[#allocation6 + $0x9]]
    %v147 = vstv %s145
    %v148 = vstv %s146
    %v149 = vsel %vm117, %v147, %v148
    %s150 = sld [smem:[#allocation6 + $0x1]]
    %s151 = sld [smem:[#allocation6 + $0xa]]
    %v152 = vstv %s150
    %v153 = vstv %s151
    %v154 = vsel %vm117, %v152, %v153
    %s155 = sld [smem:[#allocation6 + $0x2]]
    %s156 = sld [smem:[#allocation6 + $0xb]]
    %v157 = vstv %s155
    %v158 = vstv %s156
    %v159 = vsel %vm117, %v157, %v158
    %s160 = sld [smem:[#allocation6 + $0x3]]
    %s161 = sld [smem:[#allocation6 + $0xc]]
    %v162 = vstv %s160
    %v163 = vstv %s161
    %v164 = vsel %vm117, %v162, %v163
    %s165 = sld [smem:[#allocation6 + $0x4]]
    %s166 = sld [smem:[#allocation6 + $0xd]]
    %v167 = vstv %s165
    %v168 = vstv %s166
    %v169 = vsel %vm117, %v167, %v168
    %s170 = sld [smem:[#allocation6 + $0x5]]
    %s171 = sld [smem:[#allocation6 + $0xe]]
    %v172 = vstv %s170
    %v173 = vstv %s171
    %v174 = vsel %vm117, %v172, %v173
    %s175 = sld [smem:[#allocation6 + $0x6]]
    %s176 = sld [smem:[#allocation6 + $0xf]]
    %v177 = vstv %s175
    %v178 = vstv %s176
    %v179 = vsel %vm117, %v177, %v178
    %s180 = sld [smem:[#allocation6 + $0x7]]
    %s181 = sld [smem:[#allocation6 + $0x10]]
    %v182 = vstv %s180
    %v183 = vstv %s181
    %v184 = vsel %vm117, %v182, %v183
    %s185 = sld [smem:[#allocation6 + $0x8]]
    %s186 = sld [smem:[#allocation6 + $0x11]]
    %v187 = vstv %s185
    %v188 = vstv %s186
    %v189 = vsel %vm117, %v187, %v188
    %s190 = sld [smem:[#allocation6 + $0x12]]
    %s191 = sld [smem:[#allocation6 + $0x1b]]
    %v192 = vstv %s190
    %v193 = vstv %s191
    %v194 = vsel %vm117, %v192, %v193
    %s195 = sld [smem:[#allocation6 + $0x13]]
    %s196 = sld [smem:[#allocation6 + $0x1c]]
    %v197 = vstv %s195
    %v198 = vstv %s196
    %v199 = vsel %vm117, %v197, %v198
    %s200 = sld [smem:[#allocation6 + $0x14]]
    %s201 = sld [smem:[#allocation6 + $0x1d]]
    %v202 = vstv %s200
    %v203 = vstv %s201
    %v204 = vsel %vm117, %v202, %v203
    %s205 = sld [smem:[#allocation6 + $0x15]]
    %s206 = sld [smem:[#allocation6 + $0x1e]]
    %v207 = vstv %s205
    %v208 = vstv %s206
    %v209 = vsel %vm117, %v207, %v208
    %s210 = sld [smem:[#allocation6 + $0x16]]
    %s211 = sld [smem:[#allocation6 + $0x1f]]
    %v212 = vstv %s210
    %v213 = vstv %s211
    %v214 = vsel %vm117, %v212, %v213
    %s215 = sld [smem:[#allocation6 + $0x17]]
    %s216 = sld [smem:[#allocation6 + $0x20]]
    %v217 = vstv %s215
    %v218 = vstv %s216
    %v219 = vsel %vm117, %v217, %v218
    %s220 = sld [smem:[#allocation6 + $0x18]]
    %s221 = sld [smem:[#allocation6 + $0x21]]
    %v222 = vstv %s220
    %v223 = vstv %s221
    %v224 = vsel %vm117, %v222, %v223
    %s225 = sld [smem:[#allocation6 + $0x19]]
    %s226 = sld [smem:[#allocation6 + $0x22]]
    %v227 = vstv %s225
    %v228 = vstv %s226
    %v229 = vsel %vm117, %v227, %v228
    %s230 = sld [smem:[#allocation6 + $0x1a]]
    %s231 = sld [smem:[#allocation6 + $0x23]]
    %v232 = vstv %s230
    %v233 = vstv %s231
    %v234 = vsel %vm117, %v232, %v233
    %s235 = sld [smem:[#allocation6 + $0x24]]
    %s236 = sld [smem:[#allocation6 + $0x2d]]
    %v237 = vstv %s235
    %v238 = vstv %s236
    %v239 = vsel %vm117, %v237, %v238
    %s240 = sld [smem:[#allocation6 + $0x25]]
    %s241 = sld [smem:[#allocation6 + $0x2e]]
    %v242 = vstv %s240
    %v243 = vstv %s241
    %v244 = vsel %vm117, %v242, %v243
    %s245 = sld [smem:[#allocation6 + $0x26]]
    %s246 = sld [smem:[#allocation6 + $0x2f]]
    %v247 = vstv %s245
    %v248 = vstv %s246
    %v249 = vsel %vm117, %v247, %v248
    %s250 = sld [smem:[#allocation6 + $0x27]]
    %s251 = sld [smem:[#allocation6 + $0x30]]
    %v252 = vstv %s250
    %v253 = vstv %s251
    %v254 = vsel %vm117, %v252, %v253
    %s255 = sld [smem:[#allocation6 + $0x28]]
    %s256 = sld [smem:[#allocation6 + $0x31]]
    %v257 = vstv %s255
    %v258 = vstv %s256
    %v259 = vsel %vm117, %v257, %v258
    %s260 = sld [smem:[#allocation6 + $0x29]]
    %s261 = sld [smem:[#allocation6 + $0x32]]
    %v262 = vstv %s260
    %v263 = vstv %s261
    %v264 = vsel %vm117, %v262, %v263
    %s265 = sld [smem:[#allocation6 + $0x2a]]
    %s266 = sld [smem:[#allocation6 + $0x33]]
    %v267 = vstv %s265
    %v268 = vstv %s266
    %v269 = vsel %vm117, %v267, %v268
    %s270 = sld [smem:[#allocation6 + $0x2b]]
    %s271 = sld [smem:[#allocation6 + $0x34]]
    %v272 = vstv %s270
    %v273 = vstv %s271
    %v274 = vsel %vm117, %v272, %v273
    %s275 = sld [smem:[#allocation6 + $0x2c]]
    %s276 = sld [smem:[#allocation6 + $0x35]]
    %v277 = vstv %s275
    %v278 = vstv %s276
    %v279 = vsel %vm117, %v277, %v278
    %s280 = sld [smem:[#allocation6 + $0x36]]
    %s281 = sld [smem:[#allocation6 + $0x3f]]
    %v282 = vstv %s280
    %v283 = vstv %s281
    %v284 = vsel %vm117, %v282, %v283
    %s285 = sld [smem:[#allocation6 + $0x37]]
    %s286 = sld [smem:[#allocation6 + $0x40]]
    %v287 = vstv %s285
    %v288 = vstv %s286
    %v289 = vsel %vm117, %v287, %v288
    %s290 = sld [smem:[#allocation6 + $0x38]]
    %s291 = sld [smem:[#allocation6 + $0x41]]
    %v292 = vstv %s290
    %v293 = vstv %s291
    %v294 = vsel %vm117, %v292, %v293
    %s295 = sld [smem:[#allocation6 + $0x39]]
    %s296 = sld [smem:[#allocation6 + $0x42]]
    %v297 = vstv %s295
    %v298 = vstv %s296
    %v299 = vsel %vm117, %v297, %v298
    %s300 = sld [smem:[#allocation6 + $0x3a]]
    %s301 = sld [smem:[#allocation6 + $0x43]]
    %v302 = vstv %s300
    %v303 = vstv %s301
    %v304 = vsel %vm117, %v302, %v303
    %s305 = sld [smem:[#allocation6 + $0x3b]]
    %s306 = sld [smem:[#allocation6 + $0x44]]
    %v307 = vstv %s305
    %v308 = vstv %s306
    %v309 = vsel %vm117, %v307, %v308
    %s310 = sld [smem:[#allocation6 + $0x3c]]
    %s311 = sld [smem:[#allocation6 + $0x45]]
    %v312 = vstv %s310
    %v313 = vstv %s311
    %v314 = vsel %vm117, %v312, %v313
    %s315 = sld [smem:[#allocation6 + $0x3d]]
    %s316 = sld [smem:[#allocation6 + $0x46]]
    %v317 = vstv %s315
    %v318 = vstv %s316
    %v319 = vsel %vm117, %v317, %v318
    %s320 = sld [smem:[#allocation6 + $0x3e]]
    %s321 = sld [smem:[#allocation6 + $0x47]]
    %v322 = vstv %s320
    %v323 = vstv %s321
    %v324 = vsel %vm117, %v322, %v323
    %s325 = sld [smem:[#allocation7]]
    %s326 = sld [smem:[#allocation7 + $0x1]]
    %v327 = vstv %s325
    %v328 = vstv %s326
    %v329 = vsel %vm117, %v327, %v328
    %s330 = sld [smem:[#allocation7 + $0x2]]
    %s331 = sld [smem:[#allocation7 + $0x3]]
    %v332 = vstv %s330
    %v333 = vstv %s331
    %v334 = vsel %vm117, %v332, %v333
    %s335 = sld [smem:[#allocation7 + $0x4]]
    %s336 = sld [smem:[#allocation7 + $0x5]]
    %v337 = vstv %s335
    %v338 = vstv %s336
    %v339 = vsel %vm117, %v337, %v338
    %s340 = sld [smem:[#allocation7 + $0x6]]
    %s341 = sld [smem:[#allocation7 + $0x7]]
    %v342 = vstv %s340
    %v343 = vstv %s341
    %v344 = vsel %vm117, %v342, %v343
    %v345 = vrot.slane %v95, 7
    %v346 = vrot.slane %v96, 7
    %v347 = vrot.slane %v97, 7
    %v348 = vrot.slane %v98, 7
    %v349 = vrot.slane %v99, 7
    %v350 = vrot.slane %v100, 7
    %v351 = vrot.slane %v101, 7
    %v352 = vrot.slane %v102, 7
    %vm353 = vcmp.lt.s32.totalorder %v121, 1
    %v354 = vsel %vm353, %v351, %v352
    %v355 = vsel %vm353, %v350, %v351
    %v356 = vsel %vm353, %v349, %v350
    %v357 = vsel %vm353, %v348, %v349
    %v358 = vsel %vm353, %v347, %v348
    %v359 = vsel %vm353, %v346, %v347
    %v360 = vsel %vm353, %v345, %v346
    %v361 = vsel %vm353, %v352, %v345
    %v362 = vsel %vm129, 1, 0
    %v363 = vsel %vm130, 1, 0
    %v364 = vsel %vm131, 1, 0
    %v365 = vsel %vm132, 1, 0
    %v366 = vsel %vm133, 1, 0
    %v367 = vsel %vm134, 1, 0
    %v368 = vsel %vm135, 1, 0
    %v369 = vsel %vm136, 1, 0
    %vm370 = vcmp.eq.s32.totalorder %v362, 1
    %vm371 = vcmp.eq.s32.totalorder %v363, 1
    %vm372 = vcmp.eq.s32.totalorder %v364, 1
    %vm373 = vcmp.eq.s32.totalorder %v365, 1
    %vm374 = vcmp.eq.s32.totalorder %v366, 1
    %vm375 = vcmp.eq.s32.totalorder %v367, 1
    %vm376 = vcmp.eq.s32.totalorder %v368, 1
    %vm377 = vcmp.eq.s32.totalorder %v369, 1
    %v378 = vsel %vm370, %v361, 0.0
    %v379 = vsel %vm371, %v360, 0.0
    %v380 = vsel %vm372, %v359, 0.0
    %v381 = vsel %vm373, %v358, 0.0
    %v382 = vsel %vm374, %v357, 0.0
    %v383 = vsel %vm375, %v356, 0.0
    %v384 = vsel %vm376, %v355, 0.0
    %v385 = vsel %vm377, %v354, 0.0
    %386 = vrot.lane.b32.xlu0 %v378, 1
    %v387 = vpop.permute.xlu0 %386
    %388 = vrot.lane.b32.xlu0 %v379, 1
    %v389 = vpop.permute.xlu0 %388
    %390 = vrot.lane.b32.xlu0 %v380, 1
    %v391 = vpop.permute.xlu0 %390
    %392 = vrot.lane.b32.xlu0 %v381, 1
    %v393 = vpop.permute.xlu0 %392
    %394 = vrot.lane.b32.xlu0 %v382, 1
    %v395 = vpop.permute.xlu0 %394
    %396 = vrot.lane.b32.xlu0 %v383, 1
    %v397 = vpop.permute.xlu0 %396
    %398 = vrot.lane.b32.xlu0 %v384, 1
    %v399 = vpop.permute.xlu0 %398
    %400 = vrot.lane.b32.xlu0 %v385, 1
    %v401 = vpop.permute.xlu0 %400
    %v402 = vsel %vm118, 1, 0
    %vm403 = vcmp.eq.s32.totalorder %v402, 1
    %v404 = vsel %vm403, %v387, 0.0
    %v405 = vsel %vm403, %v389, 0.0
    %v406 = vsel %vm403, %v391, 0.0
    %v407 = vsel %vm403, %v393, 0.0
    %v408 = vsel %vm403, %v395, 0.0
    %v409 = vsel %vm403, %v397, 0.0
    %v410 = vsel %vm403, %v399, 0.0
    %v411 = vsel %vm403, %v401, 0.0
    %v412 = vmul.f32 %v149, %v404
    %v413 = vmul.f32 %v149, %v405
    %v414 = vmul.f32 %v149, %v406
    %v415 = vmul.f32 %v149, %v407
    %v416 = vmul.f32 %v149, %v408
    %v417 = vmul.f32 %v149, %v409
    %v418 = vmul.f32 %v149, %v410
    %v419 = vmul.f32 %v149, %v411
    %v420 = vadd.f32 %v412, 0.0
    %v421 = vadd.f32 %v413, 0.0
    %v422 = vadd.f32 %v414, 0.0
    %v423 = vadd.f32 %v415, 0.0
    %v424 = vadd.f32 %v416, 0.0
    %v425 = vadd.f32 %v417, 0.0
    %v426 = vadd.f32 %v418, 0.0
    %v427 = vadd.f32 %v419, 0.0
    %v428 = vmul.f32 %v194, %v404
    %v429 = vmul.f32 %v194, %v405
    %v430 = vmul.f32 %v194, %v406
    %v431 = vmul.f32 %v194, %v407
    %v432 = vmul.f32 %v194, %v408
    %v433 = vmul.f32 %v194, %v409
    %v434 = vmul.f32 %v194, %v410
    %v435 = vmul.f32 %v194, %v411
    %v436 = vadd.f32 %v428, 0.0
    %v437 = vadd.f32 %v429, 0.0
    %v438 = vadd.f32 %v430, 0.0
    %v439 = vadd.f32 %v431, 0.0
    %v440 = vadd.f32 %v432, 0.0
    %v441 = vadd.f32 %v433, 0.0
    %v442 = vadd.f32 %v434, 0.0
    %v443 = vadd.f32 %v435, 0.0
    %v444 = vmul.f32 %v239, %v404
    %v445 = vmul.f32 %v239, %v405
    %v446 = vmul.f32 %v239, %v406
    %v447 = vmul.f32 %v239, %v407
    %v448 = vmul.f32 %v239, %v408
    %v449 = vmul.f32 %v239, %v409
    %v450 = vmul.f32 %v239, %v410
    %v451 = vmul.f32 %v239, %v411
    %v452 = vadd.f32 %v444, 0.0
    %v453 = vadd.f32 %v445, 0.0
    %v454 = vadd.f32 %v446, 0.0
    %v455 = vadd.f32 %v447, 0.0
    %v456 = vadd.f32 %v448, 0.0
    %v457 = vadd.f32 %v449, 0.0
    %v458 = vadd.f32 %v450, 0.0
    %v459 = vadd.f32 %v451, 0.0
    %v460 = vmul.f32 %v284, %v404
    %v461 = vmul.f32 %v284, %v405
    %v462 = vmul.f32 %v284, %v406
    %v463 = vmul.f32 %v284, %v407
    %v464 = vmul.f32 %v284, %v408
    %v465 = vmul.f32 %v284, %v409
    %v466 = vmul.f32 %v284, %v410
    %v467 = vmul.f32 %v284, %v411
    %v468 = vadd.f32 %v460, 0.0
    %v469 = vadd.f32 %v461, 0.0
    %v470 = vadd.f32 %v462, 0.0
    %v471 = vadd.f32 %v463, 0.0
    %v472 = vadd.f32 %v464, 0.0
    %v473 = vadd.f32 %v465, 0.0
    %v474 = vadd.f32 %v466, 0.0
    %v475 = vadd.f32 %v467, 0.0
    %v476 = vmul.f32 %v154, %v378
    %v477 = vmul.f32 %v154, %v379
    %v478 = vmul.f32 %v154, %v380
    %v479 = vmul.f32 %v154, %v381
    %v480 = vmul.f32 %v154, %v382
    %v481 = vmul.f32 %v154, %v383
    %v482 = vmul.f32 %v154, %v384
    %v483 = vmul.f32 %v154, %v385
    %v484 = vadd.f32 %v420, %v476
    %v485 = vadd.f32 %v421, %v477
    %v486 = vadd.f32 %v422, %v478
    %v487 = vadd.f32 %v423, %v479
    %v488 = vadd.f32 %v424, %v480
    %v489 = vadd.f32 %v425, %v481
    %v490 = vadd.f32 %v426, %v482
    %v491 = vadd.f32 %v427, %v483
    %v492 = vmul.f32 %v199, %v378
    %v493 = vmul.f32 %v199, %v379
    %v494 = vmul.f32 %v199, %v380
    %v495 = vmul.f32 %v199, %v381
    %v496 = vmul.f32 %v199, %v382
    %v497 = vmul.f32 %v199, %v383
    %v498 = vmul.f32 %v199, %v384
    %v499 = vmul.f32 %v199, %v385
    %v500 = vadd.f32 %v436, %v492
    %v501 = vadd.f32 %v437, %v493
    %v502 = vadd.f32 %v438, %v494
    %v503 = vadd.f32 %v439, %v495
    %v504 = vadd.f32 %v440, %v496
    %v505 = vadd.f32 %v441, %v497
    %v506 = vadd.f32 %v442, %v498
    %v507 = vadd.f32 %v443, %v499
    %v508 = vmul.f32 %v244, %v378
    %v509 = vmul.f32 %v244, %v379
    %v510 = vmul.f32 %v244, %v380
    %v511 = vmul.f32 %v244, %v381
    %v512 = vmul.f32 %v244, %v382
    %v513 = vmul.f32 %v244, %v383
    %v514 = vmul.f32 %v244, %v384
    %v515 = vmul.f32 %v244, %v385
    %v516 = vadd.f32 %v452, %v508
    %v517 = vadd.f32 %v453, %v509
    %v518 = vadd.f32 %v454, %v510
    %v519 = vadd.f32 %v455, %v511
    %v520 = vadd.f32 %v456, %v512
    %v521 = vadd.f32 %v457, %v513
    %v522 = vadd.f32 %v458, %v514
    %v523 = vadd.f32 %v459, %v515
    %v524 = vmul.f32 %v289, %v378
    %v525 = vmul.f32 %v289, %v379
    %v526 = vmul.f32 %v289, %v380
    %v527 = vmul.f32 %v289, %v381
    %v528 = vmul.f32 %v289, %v382
    %v529 = vmul.f32 %v289, %v383
    %v530 = vmul.f32 %v289, %v384
    %v531 = vmul.f32 %v289, %v385
    %v532 = vadd.f32 %v468, %v524
    %v533 = vadd.f32 %v469, %v525
    %v534 = vadd.f32 %v470, %v526
    %v535 = vadd.f32 %v471, %v527
    %v536 = vadd.f32 %v472, %v528
    %v537 = vadd.f32 %v473, %v529
    %v538 = vadd.f32 %v474, %v530
    %v539 = vadd.f32 %v475, %v531
    %540 = vrot.lane.b32.xlu0 %v378, 127
    %v541 = vpop.permute.xlu0 %540
    %542 = vrot.lane.b32.xlu0 %v379, 127
    %v543 = vpop.permute.xlu0 %542
    %544 = vrot.lane.b32.xlu0 %v380, 127
    %v545 = vpop.permute.xlu0 %544
    %546 = vrot.lane.b32.xlu0 %v381, 127
    %v547 = vpop.permute.xlu0 %546
    %548 = vrot.lane.b32.xlu0 %v382, 127
    %v549 = vpop.permute.xlu0 %548
    %550 = vrot.lane.b32.xlu0 %v383, 127
    %v551 = vpop.permute.xlu0 %550
    %552 = vrot.lane.b32.xlu0 %v384, 127
    %v553 = vpop.permute.xlu0 %552
    %554 = vrot.lane.b32.xlu0 %v385, 127
    %v555 = vpop.permute.xlu0 %554
    %v556 = vsel %vm119, 1, 0
    %vm557 = vcmp.eq.s32.totalorder %v556, 1
    %v558 = vsel %vm557, %v541, 0.0
    %v559 = vsel %vm557, %v543, 0.0
    %v560 = vsel %vm557, %v545, 0.0
    %v561 = vsel %vm557, %v547, 0.0
    %v562 = vsel %vm557, %v549, 0.0
    %v563 = vsel %vm557, %v551, 0.0
    %v564 = vsel %vm557, %v553, 0.0
    %v565 = vsel %vm557, %v555, 0.0
    %v566 = vmul.f32 %v159, %v558
    %v567 = vmul.f32 %v159, %v559
    %v568 = vmul.f32 %v159, %v560
    %v569 = vmul.f32 %v159, %v561
    %v570 = vmul.f32 %v159, %v562
    %v571 = vmul.f32 %v159, %v563
    %v572 = vmul.f32 %v159, %v564
    %v573 = vmul.f32 %v159, %v565
    %v574 = vadd.f32 %v484, %v566
    %v575 = vadd.f32 %v485, %v567
    %v576 = vadd.f32 %v486, %v568
    %v577 = vadd.f32 %v487, %v569
    %v578 = vadd.f32 %v488, %v570
    %v579 = vadd.f32 %v489, %v571
    %v580 = vadd.f32 %v490, %v572
    %v581 = vadd.f32 %v491, %v573
    %v582 = vmul.f32 %v204, %v558
    %v583 = vmul.f32 %v204, %v559
    %v584 = vmul.f32 %v204, %v560
    %v585 = vmul.f32 %v204, %v561
    %v586 = vmul.f32 %v204, %v562
    %v587 = vmul.f32 %v204, %v563
    %v588 = vmul.f32 %v204, %v564
    %v589 = vmul.f32 %v204, %v565
    %v590 = vadd.f32 %v500, %v582
    %v591 = vadd.f32 %v501, %v583
    %v592 = vadd.f32 %v502, %v584
    %v593 = vadd.f32 %v503, %v585
    %v594 = vadd.f32 %v504, %v586
    %v595 = vadd.f32 %v505, %v587
    %v596 = vadd.f32 %v506, %v588
    %v597 = vadd.f32 %v507, %v589
    %v598 = vmul.f32 %v249, %v558
    %v599 = vmul.f32 %v249, %v559
    %v600 = vmul.f32 %v249, %v560
    %v601 = vmul.f32 %v249, %v561
    %v602 = vmul.f32 %v249, %v562
    %v603 = vmul.f32 %v249, %v563
    %v604 = vmul.f32 %v249, %v564
    %v605 = vmul.f32 %v249, %v565
    %v606 = vadd.f32 %v516, %v598
    %v607 = vadd.f32 %v517, %v599
    %v608 = vadd.f32 %v518, %v600
    %v609 = vadd.f32 %v519, %v601
    %v610 = vadd.f32 %v520, %v602
    %v611 = vadd.f32 %v521, %v603
    %v612 = vadd.f32 %v522, %v604
    %v613 = vadd.f32 %v523, %v605
    %v614 = vmul.f32 %v294, %v558
    %v615 = vmul.f32 %v294, %v559
    %v616 = vmul.f32 %v294, %v560
    %v617 = vmul.f32 %v294, %v561
    %v618 = vmul.f32 %v294, %v562
    %v619 = vmul.f32 %v294, %v563
    %v620 = vmul.f32 %v294, %v564
    %v621 = vmul.f32 %v294, %v565
    %v622 = vadd.f32 %v532, %v614
    %v623 = vadd.f32 %v533, %v615
    %v624 = vadd.f32 %v534, %v616
    %v625 = vadd.f32 %v535, %v617
    %v626 = vadd.f32 %v536, %v618
    %v627 = vadd.f32 %v537, %v619
    %v628 = vadd.f32 %v538, %v620
    %v629 = vadd.f32 %v539, %v621
    %630 = vrot.lane.b32.xlu0 %v95, 1
    %v631 = vpop.permute.xlu0 %630
    %632 = vrot.lane.b32.xlu0 %v96, 1
    %v633 = vpop.permute.xlu0 %632
    %634 = vrot.lane.b32.xlu0 %v97, 1
    %v635 = vpop.permute.xlu0 %634
    %636 = vrot.lane.b32.xlu0 %v98, 1
    %v637 = vpop.permute.xlu0 %636
    %638 = vrot.lane.b32.xlu0 %v99, 1
    %v639 = vpop.permute.xlu0 %638
    %640 = vrot.lane.b32.xlu0 %v100, 1
    %v641 = vpop.permute.xlu0 %640
    %642 = vrot.lane.b32.xlu0 %v101, 1
    %v643 = vpop.permute.xlu0 %642
    %644 = vrot.lane.b32.xlu0 %v102, 1
    %v645 = vpop.permute.xlu0 %644
    %v646 = vsel %vm403, %v631, 0.0
    %v647 = vsel %vm403, %v633, 0.0
    %v648 = vsel %vm403, %v635, 0.0
    %v649 = vsel %vm403, %v637, 0.0
    %v650 = vsel %vm403, %v639, 0.0
    %v651 = vsel %vm403, %v641, 0.0
    %v652 = vsel %vm403, %v643, 0.0
    %v653 = vsel %vm403, %v645, 0.0
    %v654 = vmul.f32 %v164, %v646
    %v655 = vmul.f32 %v164, %v647
    %v656 = vmul.f32 %v164, %v648
    %v657 = vmul.f32 %v164, %v649
    %v658 = vmul.f32 %v164, %v650
    %v659 = vmul.f32 %v164, %v651
    %v660 = vmul.f32 %v164, %v652
    %v661 = vmul.f32 %v164, %v653
    %v662 = vadd.f32 %v574, %v654
    %v663 = vadd.f32 %v575, %v655
    %v664 = vadd.f32 %v576, %v656
    %v665 = vadd.f32 %v577, %v657
    %v666 = vadd.f32 %v578, %v658
    %v667 = vadd.f32 %v579, %v659
    %v668 = vadd.f32 %v580, %v660
    %v669 = vadd.f32 %v581, %v661
    %v670 = vmul.f32 %v209, %v646
    %v671 = vmul.f32 %v209, %v647
    %v672 = vmul.f32 %v209, %v648
    %v673 = vmul.f32 %v209, %v649
    %v674 = vmul.f32 %v209, %v650
    %v675 = vmul.f32 %v209, %v651
    %v676 = vmul.f32 %v209, %v652
    %v677 = vmul.f32 %v209, %v653
    %v678 = vadd.f32 %v590, %v670
    %v679 = vadd.f32 %v591, %v671
    %v680 = vadd.f32 %v592, %v672
    %v681 = vadd.f32 %v593, %v673
    %v682 = vadd.f32 %v594, %v674
    %v683 = vadd.f32 %v595, %v675
    %v684 = vadd.f32 %v596, %v676
    %v685 = vadd.f32 %v597, %v677
    %v686 = vmul.f32 %v254, %v646
    %v687 = vmul.f32 %v254, %v647
    %v688 = vmul.f32 %v254, %v648
    %v689 = vmul.f32 %v254, %v649
    %v690 = vmul.f32 %v254, %v650
    %v691 = vmul.f32 %v254, %v651
    %v692 = vmul.f32 %v254, %v652
    %v693 = vmul.f32 %v254, %v653
    %v694 = vadd.f32 %v606, %v686
    %v695 = vadd.f32 %v607, %v687
    %v696 = vadd.f32 %v608, %v688
    %v697 = vadd.f32 %v609, %v689
    %v698 = vadd.f32 %v610, %v690
    %v699 = vadd.f32 %v611, %v691
    %v700 = vadd.f32 %v612, %v692
    %v701 = vadd.f32 %v613, %v693
    %v702 = vmul.f32 %v299, %v646
    %v703 = vmul.f32 %v299, %v647
    %v704 = vmul.f32 %v299, %v648
    %v705 = vmul.f32 %v299, %v649
    %v706 = vmul.f32 %v299, %v650
    %v707 = vmul.f32 %v299, %v651
    %v708 = vmul.f32 %v299, %v652
    %v709 = vmul.f32 %v299, %v653
    %v710 = vadd.f32 %v622, %v702
    %v711 = vadd.f32 %v623, %v703
    %v712 = vadd.f32 %v624, %v704
    %v713 = vadd.f32 %v625, %v705
    %v714 = vadd.f32 %v626, %v706
    %v715 = vadd.f32 %v627, %v707
    %v716 = vadd.f32 %v628, %v708
    %v717 = vadd.f32 %v629, %v709
    %v718 = vmul.f32 %v169, %v95
    %v719 = vmul.f32 %v169, %v96
    %v720 = vmul.f32 %v169, %v97
    %v721 = vmul.f32 %v169, %v98
    %v722 = vmul.f32 %v169, %v99
    %v723 = vmul.f32 %v169, %v100
    %v724 = vmul.f32 %v169, %v101
    %v725 = vmul.f32 %v169, %v102
    %v726 = vadd.f32 %v662, %v718
    %v727 = vadd.f32 %v663, %v719
    %v728 = vadd.f32 %v664, %v720
    %v729 = vadd.f32 %v665, %v721
    %v730 = vadd.f32 %v666, %v722
    %v731 = vadd.f32 %v667, %v723
    %v732 = vadd.f32 %v668, %v724
    %v733 = vadd.f32 %v669, %v725
    %v734 = vmul.f32 %v214, %v95
    %v735 = vmul.f32 %v214, %v96
    %v736 = vmul.f32 %v214, %v97
    %v737 = vmul.f32 %v214, %v98
    %v738 = vmul.f32 %v214, %v99
    %v739 = vmul.f32 %v214, %v100
    %v740 = vmul.f32 %v214, %v101
    %v741 = vmul.f32 %v214, %v102
    %v742 = vadd.f32 %v678, %v734
    %v743 = vadd.f32 %v679, %v735
    %v744 = vadd.f32 %v680, %v736
    %v745 = vadd.f32 %v681, %v737
    %v746 = vadd.f32 %v682, %v738
    %v747 = vadd.f32 %v683, %v739
    %v748 = vadd.f32 %v684, %v740
    %v749 = vadd.f32 %v685, %v741
    %v750 = vmul.f32 %v259, %v95
    %v751 = vmul.f32 %v259, %v96
    %v752 = vmul.f32 %v259, %v97
    %v753 = vmul.f32 %v259, %v98
    %v754 = vmul.f32 %v259, %v99
    %v755 = vmul.f32 %v259, %v100
    %v756 = vmul.f32 %v259, %v101
    %v757 = vmul.f32 %v259, %v102
    %v758 = vadd.f32 %v694, %v750
    %v759 = vadd.f32 %v695, %v751
    %v760 = vadd.f32 %v696, %v752
    %v761 = vadd.f32 %v697, %v753
    %v762 = vadd.f32 %v698, %v754
    %v763 = vadd.f32 %v699, %v755
    %v764 = vadd.f32 %v700, %v756
    %v765 = vadd.f32 %v701, %v757
    %v766 = vmul.f32 %v304, %v95
    %v767 = vmul.f32 %v304, %v96
    %v768 = vmul.f32 %v304, %v97
    %v769 = vmul.f32 %v304, %v98
    %v770 = vmul.f32 %v304, %v99
    %v771 = vmul.f32 %v304, %v100
    %v772 = vmul.f32 %v304, %v101
    %v773 = vmul.f32 %v304, %v102
    %v774 = vadd.f32 %v710, %v766
    %v775 = vadd.f32 %v711, %v767
    %v776 = vadd.f32 %v712, %v768
    %v777 = vadd.f32 %v713, %v769
    %v778 = vadd.f32 %v714, %v770
    %v779 = vadd.f32 %v715, %v771
    %v780 = vadd.f32 %v716, %v772
    %v781 = vadd.f32 %v717, %v773
    %782 = vrot.lane.b32.xlu0 %v95, 127
    %v783 = vpop.permute.xlu0 %782
    %784 = vrot.lane.b32.xlu0 %v96, 127
    %v785 = vpop.permute.xlu0 %784
    %786 = vrot.lane.b32.xlu0 %v97, 127
    %v787 = vpop.permute.xlu0 %786
    %788 = vrot.lane.b32.xlu0 %v98, 127
    %v789 = vpop.permute.xlu0 %788
    %790 = vrot.lane.b32.xlu0 %v99, 127
    %v791 = vpop.permute.xlu0 %790
    %792 = vrot.lane.b32.xlu0 %v100, 127
    %v793 = vpop.permute.xlu0 %792
    %794 = vrot.lane.b32.xlu0 %v101, 127
    %v795 = vpop.permute.xlu0 %794
    %796 = vrot.lane.b32.xlu0 %v102, 127
    %v797 = vpop.permute.xlu0 %796
    %v798 = vsel %vm557, %v783, 0.0
    %v799 = vsel %vm557, %v785, 0.0
    %v800 = vsel %vm557, %v787, 0.0
    %v801 = vsel %vm557, %v789, 0.0
    %v802 = vsel %vm557, %v791, 0.0
    %v803 = vsel %vm557, %v793, 0.0
    %v804 = vsel %vm557, %v795, 0.0
    %v805 = vsel %vm557, %v797, 0.0
    %v806 = vmul.f32 %v174, %v798
    %v807 = vmul.f32 %v174, %v799
    %v808 = vmul.f32 %v174, %v800
    %v809 = vmul.f32 %v174, %v801
    %v810 = vmul.f32 %v174, %v802
    %v811 = vmul.f32 %v174, %v803
    %v812 = vmul.f32 %v174, %v804
    %v813 = vmul.f32 %v174, %v805
    %v814 = vadd.f32 %v726, %v806
    %v815 = vadd.f32 %v727, %v807
    %v816 = vadd.f32 %v728, %v808
    %v817 = vadd.f32 %v729, %v809
    %v818 = vadd.f32 %v730, %v810
    %v819 = vadd.f32 %v731, %v811
    %v820 = vadd.f32 %v732, %v812
    %v821 = vadd.f32 %v733, %v813
    %v822 = vmul.f32 %v219, %v798
    %v823 = vmul.f32 %v219, %v799
    %v824 = vmul.f32 %v219, %v800
    %v825 = vmul.f32 %v219, %v801
    %v826 = vmul.f32 %v219, %v802
    %v827 = vmul.f32 %v219, %v803
    %v828 = vmul.f32 %v219, %v804
    %v829 = vmul.f32 %v219, %v805
    %v830 = vadd.f32 %v742, %v822
    %v831 = vadd.f32 %v743, %v823
    %v832 = vadd.f32 %v744, %v824
    %v833 = vadd.f32 %v745, %v825
    %v834 = vadd.f32 %v746, %v826
    %v835 = vadd.f32 %v747, %v827
    %v836 = vadd.f32 %v748, %v828
    %v837 = vadd.f32 %v749, %v829
    %v838 = vmul.f32 %v264, %v798
    %v839 = vmul.f32 %v264, %v799
    %v840 = vmul.f32 %v264, %v800
    %v841 = vmul.f32 %v264, %v801
    %v842 = vmul.f32 %v264, %v802
    %v843 = vmul.f32 %v264, %v803
    %v844 = vmul.f32 %v264, %v804
    %v845 = vmul.f32 %v264, %v805
    %v846 = vadd.f32 %v758, %v838
    %v847 = vadd.f32 %v759, %v839
    %v848 = vadd.f32 %v760, %v840
    %v849 = vadd.f32 %v761, %v841
    %v850 = vadd.f32 %v762, %v842
    %v851 = vadd.f32 %v763, %v843
    %v852 = vadd.f32 %v764, %v844
    %v853 = vadd.f32 %v765, %v845
    %v854 = vmul.f32 %v309, %v798
    %v855 = vmul.f32 %v309, %v799
    %v856 = vmul.f32 %v309, %v800
    %v857 = vmul.f32 %v309, %v801
    %v858 = vmul.f32 %v309, %v802
    %v859 = vmul.f32 %v309, %v803
    %v860 = vmul.f32 %v309, %v804
    %v861 = vmul.f32 %v309, %v805
    %v862 = vadd.f32 %v774, %v854
    %v863 = vadd.f32 %v775, %v855
    %v864 = vadd.f32 %v776, %v856
    %v865 = vadd.f32 %v777, %v857
    %v866 = vadd.f32 %v778, %v858
    %v867 = vadd.f32 %v779, %v859
    %v868 = vadd.f32 %v780, %v860
    %v869 = vadd.f32 %v781, %v861
    %v870 = vrot.slane %v95, 1
    %v871 = vrot.slane %v96, 1
    %v872 = vrot.slane %v97, 1
    %v873 = vrot.slane %v98, 1
    %v874 = vrot.slane %v99, 1
    %v875 = vrot.slane %v100, 1
    %v876 = vrot.slane %v101, 1
    %v877 = vrot.slane %v102, 1
    %vm878 = vcmp.lt.s32.totalorder %v121, 7
    %v879 = vsel %vm878, %v876, %v877
    %v880 = vsel %vm878, %v875, %v876
    %v881 = vsel %vm878, %v874, %v875
    %v882 = vsel %vm878, %v873, %v874
    %v883 = vsel %vm878, %v872, %v873
    %v884 = vsel %vm878, %v871, %v872
    %v885 = vsel %vm878, %v870, %v871
    %v886 = vsel %vm878, %v877, %v870
    %v887 = vsel %vm137, 1, 0
    %v888 = vsel %vm138, 1, 0
    %v889 = vsel %vm139, 1, 0
    %v890 = vsel %vm140, 1, 0
    %v891 = vsel %vm141, 1, 0
    %v892 = vsel %vm142, 1, 0
    %v893 = vsel %vm143, 1, 0
    %v894 = vsel %vm144, 1, 0
    %vm895 = vcmp.eq.s32.totalorder %v887, 1
    %vm896 = vcmp.eq.s32.totalorder %v888, 1
    %vm897 = vcmp.eq.s32.totalorder %v889, 1
    %vm898 = vcmp.eq.s32.totalorder %v890, 1
    %vm899 = vcmp.eq.s32.totalorder %v891, 1
    %vm900 = vcmp.eq.s32.totalorder %v892, 1
    %vm901 = vcmp.eq.s32.totalorder %v893, 1
    %vm902 = vcmp.eq.s32.totalorder %v894, 1
    %v903 = vsel %vm895, %v885, 0.0
    %v904 = vsel %vm896, %v884, 0.0
    %v905 = vsel %vm897, %v883, 0.0
    %v906 = vsel %vm898, %v882, 0.0
    %v907 = vsel %vm899, %v881, 0.0
    %v908 = vsel %vm900, %v880, 0.0
    %v909 = vsel %vm901, %v879, 0.0
    %v910 = vsel %vm902, %v886, 0.0
    %911 = vrot.lane.b32.xlu0 %v903, 1
    %v912 = vpop.permute.xlu0 %911
    %913 = vrot.lane.b32.xlu0 %v904, 1
    %v914 = vpop.permute.xlu0 %913
    %915 = vrot.lane.b32.xlu0 %v905, 1
    %v916 = vpop.permute.xlu0 %915
    %917 = vrot.lane.b32.xlu0 %v906, 1
    %v918 = vpop.permute.xlu0 %917
    %919 = vrot.lane.b32.xlu0 %v907, 1
    %v920 = vpop.permute.xlu0 %919
    %921 = vrot.lane.b32.xlu0 %v908, 1
    %v922 = vpop.permute.xlu0 %921
    %923 = vrot.lane.b32.xlu0 %v909, 1
    %v924 = vpop.permute.xlu0 %923
    %925 = vrot.lane.b32.xlu0 %v910, 1
    %v926 = vpop.permute.xlu0 %925
    %v927 = vsel %vm403, %v912, 0.0
    %v928 = vsel %vm403, %v914, 0.0
    %v929 = vsel %vm403, %v916, 0.0
    %v930 = vsel %vm403, %v918, 0.0
    %v931 = vsel %vm403, %v920, 0.0
    %v932 = vsel %vm403, %v922, 0.0
    %v933 = vsel %vm403, %v924, 0.0
    %v934 = vsel %vm403, %v926, 0.0
    %v935 = vmul.f32 %v179, %v927
    %v936 = vmul.f32 %v179, %v928
    %v937 = vmul.f32 %v179, %v929
    %v938 = vmul.f32 %v179, %v930
    %v939 = vmul.f32 %v179, %v931
    %v940 = vmul.f32 %v179, %v932
    %v941 = vmul.f32 %v179, %v933
    %v942 = vmul.f32 %v179, %v934
    %v943 = vadd.f32 %v814, %v935
    %v944 = vadd.f32 %v815, %v936
    %v945 = vadd.f32 %v816, %v937
    %v946 = vadd.f32 %v817, %v938
    %v947 = vadd.f32 %v818, %v939
    %v948 = vadd.f32 %v819, %v940
    %v949 = vadd.f32 %v820, %v941
    %v950 = vadd.f32 %v821, %v942
    %v951 = vmul.f32 %v224, %v927
    %v952 = vmul.f32 %v224, %v928
    %v953 = vmul.f32 %v224, %v929
    %v954 = vmul.f32 %v224, %v930
    %v955 = vmul.f32 %v224, %v931
    %v956 = vmul.f32 %v224, %v932
    %v957 = vmul.f32 %v224, %v933
    %v958 = vmul.f32 %v224, %v934
    %v959 = vadd.f32 %v830, %v951
    %v960 = vadd.f32 %v831, %v952
    %v961 = vadd.f32 %v832, %v953
    %v962 = vadd.f32 %v833, %v954
    %v963 = vadd.f32 %v834, %v955
    %v964 = vadd.f32 %v835, %v956
    %v965 = vadd.f32 %v836, %v957
    %v966 = vadd.f32 %v837, %v958
    %v967 = vmul.f32 %v269, %v927
    %v968 = vmul.f32 %v269, %v928
    %v969 = vmul.f32 %v269, %v929
    %v970 = vmul.f32 %v269, %v930
    %v971 = vmul.f32 %v269, %v931
    %v972 = vmul.f32 %v269, %v932
    %v973 = vmul.f32 %v269, %v933
    %v974 = vmul.f32 %v269, %v934
    %v975 = vadd.f32 %v846, %v967
    %v976 = vadd.f32 %v847, %v968
    %v977 = vadd.f32 %v848, %v969
    %v978 = vadd.f32 %v849, %v970
    %v979 = vadd.f32 %v850, %v971
    %v980 = vadd.f32 %v851, %v972
    %v981 = vadd.f32 %v852, %v973
    %v982 = vadd.f32 %v853, %v974
    %v983 = vmul.f32 %v314, %v927
    %v984 = vmul.f32 %v314, %v928
    %v985 = vmul.f32 %v314, %v929
    %v986 = vmul.f32 %v314, %v930
    %v987 = vmul.f32 %v314, %v931
    %v988 = vmul.f32 %v314, %v932
    %v989 = vmul.f32 %v314, %v933
    %v990 = vmul.f32 %v314, %v934
    %v991 = vadd.f32 %v862, %v983
    %v992 = vadd.f32 %v863, %v984
    %v993 = vadd.f32 %v864, %v985
    %v994 = vadd.f32 %v865, %v986
    %v995 = vadd.f32 %v866, %v987
    %v996 = vadd.f32 %v867, %v988
    %v997 = vadd.f32 %v868, %v989
    %v998 = vadd.f32 %v869, %v990
    %v999 = vmul.f32 %v184, %v903
    %v1000 = vmul.f32 %v184, %v904
    %v1001 = vmul.f32 %v184, %v905
    %v1002 = vmul.f32 %v184, %v906
    %v1003 = vmul.f32 %v184, %v907
    %v1004 = vmul.f32 %v184, %v908
    %v1005 = vmul.f32 %v184, %v909
    %v1006 = vmul.f32 %v184, %v910
    %v1007 = vadd.f32 %v943, %v999
    %v1008 = vadd.f32 %v944, %v1000
    %v1009 = vadd.f32 %v945, %v1001
    %v1010 = vadd.f32 %v946, %v1002
    %v1011 = vadd.f32 %v947, %v1003
    %v1012 = vadd.f32 %v948, %v1004
    %v1013 = vadd.f32 %v949, %v1005
    %v1014 = vadd.f32 %v950, %v1006
    %v1015 = vmul.f32 %v229, %v903
    %v1016 = vmul.f32 %v229, %v904
    %v1017 = vmul.f32 %v229, %v905
    %v1018 = vmul.f32 %v229, %v906
    %v1019 = vmul.f32 %v229, %v907
    %v1020 = vmul.f32 %v229, %v908
    %v1021 = vmul.f32 %v229, %v909
    %v1022 = vmul.f32 %v229, %v910
    %v1023 = vadd.f32 %v959, %v1015
    %v1024 = vadd.f32 %v960, %v1016
    %v1025 = vadd.f32 %v961, %v1017
    %v1026 = vadd.f32 %v962, %v1018
    %v1027 = vadd.f32 %v963, %v1019
    %v1028 = vadd.f32 %v964, %v1020
    %v1029 = vadd.f32 %v965, %v1021
    %v1030 = vadd.f32 %v966, %v1022
    %v1031 = vmul.f32 %v274, %v903
    %v1032 = vmul.f32 %v274, %v904
    %v1033 = vmul.f32 %v274, %v905
    %v1034 = vmul.f32 %v274, %v906
    %v1035 = vmul.f32 %v274, %v907
    %v1036 = vmul.f32 %v274, %v908
    %v1037 = vmul.f32 %v274, %v909
    %v1038 = vmul.f32 %v274, %v910
    %v1039 = vadd.f32 %v975, %v1031
    %v1040 = vadd.f32 %v976, %v1032
    %v1041 = vadd.f32 %v977, %v1033
    %v1042 = vadd.f32 %v978, %v1034
    %v1043 = vadd.f32 %v979, %v1035
    %v1044 = vadd.f32 %v980, %v1036
    %v1045 = vadd.f32 %v981, %v1037
    %v1046 = vadd.f32 %v982, %v1038
    %v1047 = vmul.f32 %v319, %v903
    %v1048 = vmul.f32 %v319, %v904
    %v1049 = vmul.f32 %v319, %v905
    %v1050 = vmul.f32 %v319, %v906
    %v1051 = vmul.f32 %v319, %v907
    %v1052 = vmul.f32 %v319, %v908
    %v1053 = vmul.f32 %v319, %v909
    %v1054 = vmul.f32 %v319, %v910
    %v1055 = vadd.f32 %v991, %v1047
    %v1056 = vadd.f32 %v992, %v1048
    %v1057 = vadd.f32 %v993, %v1049
    %v1058 = vadd.f32 %v994, %v1050
    %v1059 = vadd.f32 %v995, %v1051
    %v1060 = vadd.f32 %v996, %v1052
    %v1061 = vadd.f32 %v997, %v1053
    %v1062 = vadd.f32 %v998, %v1054
    %1063 = vrot.lane.b32.xlu0 %v903, 127
    %v1064 = vpop.permute.xlu0 %1063
    %1065 = vrot.lane.b32.xlu0 %v904, 127
    %v1066 = vpop.permute.xlu0 %1065
    %1067 = vrot.lane.b32.xlu0 %v905, 127
    %v1068 = vpop.permute.xlu0 %1067
    %1069 = vrot.lane.b32.xlu0 %v906, 127
    %v1070 = vpop.permute.xlu0 %1069
    %1071 = vrot.lane.b32.xlu0 %v907, 127
    %v1072 = vpop.permute.xlu0 %1071
    %1073 = vrot.lane.b32.xlu0 %v908, 127
    %v1074 = vpop.permute.xlu0 %1073
    %1075 = vrot.lane.b32.xlu0 %v909, 127
    %v1076 = vpop.permute.xlu0 %1075
    %1077 = vrot.lane.b32.xlu0 %v910, 127
    %v1078 = vpop.permute.xlu0 %1077
    %v1079 = vsel %vm557, %v1064, 0.0
    %v1080 = vsel %vm557, %v1066, 0.0
    %v1081 = vsel %vm557, %v1068, 0.0
    %v1082 = vsel %vm557, %v1070, 0.0
    %v1083 = vsel %vm557, %v1072, 0.0
    %v1084 = vsel %vm557, %v1074, 0.0
    %v1085 = vsel %vm557, %v1076, 0.0
    %v1086 = vsel %vm557, %v1078, 0.0
    %v1087 = vmul.f32 %v189, %v1079
    %v1088 = vmul.f32 %v189, %v1080
    %v1089 = vmul.f32 %v189, %v1081
    %v1090 = vmul.f32 %v189, %v1082
    %v1091 = vmul.f32 %v189, %v1083
    %v1092 = vmul.f32 %v189, %v1084
    %v1093 = vmul.f32 %v189, %v1085
    %v1094 = vmul.f32 %v189, %v1086
    %v1095 = vadd.f32 %v1007, %v1087
    %v1096 = vadd.f32 %v1008, %v1088
    %v1097 = vadd.f32 %v1009, %v1089
    %v1098 = vadd.f32 %v1010, %v1090
    %v1099 = vadd.f32 %v1011, %v1091
    %v1100 = vadd.f32 %v1012, %v1092
    %v1101 = vadd.f32 %v1013, %v1093
    %v1102 = vadd.f32 %v1014, %v1094
    %v1103 = vmul.f32 %v234, %v1079
    %v1104 = vmul.f32 %v234, %v1080
    %v1105 = vmul.f32 %v234, %v1081
    %v1106 = vmul.f32 %v234, %v1082
    %v1107 = vmul.f32 %v234, %v1083
    %v1108 = vmul.f32 %v234, %v1084
    %v1109 = vmul.f32 %v234, %v1085
    %v1110 = vmul.f32 %v234, %v1086
    %v1111 = vadd.f32 %v1023, %v1103
    %v1112 = vadd.f32 %v1024, %v1104
    %v1113 = vadd.f32 %v1025, %v1105
    %v1114 = vadd.f32 %v1026, %v1106
    %v1115 = vadd.f32 %v1027, %v1107
    %v1116 = vadd.f32 %v1028, %v1108
    %v1117 = vadd.f32 %v1029, %v1109
    %v1118 = vadd.f32 %v1030, %v1110
    %v1119 = vmul.f32 %v279, %v1079
    %v1120 = vmul.f32 %v279, %v1080
    %v1121 = vmul.f32 %v279, %v1081
    %v1122 = vmul.f32 %v279, %v1082
    %v1123 = vmul.f32 %v279, %v1083
    %v1124 = vmul.f32 %v279, %v1084
    %v1125 = vmul.f32 %v279, %v1085
    %v1126 = vmul.f32 %v279, %v1086
    %v1127 = vadd.f32 %v1039, %v1119
    %v1128 = vadd.f32 %v1040, %v1120
    %v1129 = vadd.f32 %v1041, %v1121
    %v1130 = vadd.f32 %v1042, %v1122
    %v1131 = vadd.f32 %v1043, %v1123
    %v1132 = vadd.f32 %v1044, %v1124
    %v1133 = vadd.f32 %v1045, %v1125
    %v1134 = vadd.f32 %v1046, %v1126
    %v1135 = vmul.f32 %v324, %v1079
    %v1136 = vmul.f32 %v324, %v1080
    %v1137 = vmul.f32 %v324, %v1081
    %v1138 = vmul.f32 %v324, %v1082
    %v1139 = vmul.f32 %v324, %v1083
    %v1140 = vmul.f32 %v324, %v1084
    %v1141 = vmul.f32 %v324, %v1085
    %v1142 = vmul.f32 %v324, %v1086
    %v1143 = vadd.f32 %v1055, %v1135
    %v1144 = vadd.f32 %v1056, %v1136
    %v1145 = vadd.f32 %v1057, %v1137
    %v1146 = vadd.f32 %v1058, %v1138
    %v1147 = vadd.f32 %v1059, %v1139
    %v1148 = vadd.f32 %v1060, %v1140
    %v1149 = vadd.f32 %v1061, %v1141
    %v1150 = vadd.f32 %v1062, %v1142
    %v1151 = vadd.f32 %v1095, %v329
    %v1152 = vadd.f32 %v1096, %v329
    %v1153 = vadd.f32 %v1097, %v329
    %v1154 = vadd.f32 %v1098, %v329
    %v1155 = vadd.f32 %v1099, %v329
    %v1156 = vadd.f32 %v1100, %v329
    %v1157 = vadd.f32 %v1101, %v329
    %v1158 = vadd.f32 %v1102, %v329
    %1159 = vst [vmem:[#allocation9] sm:$0xff] %v1151
    %1160 = vst [vmem:[#allocation9 + $0x8] sm:$0xff] %v1152
    %1161 = vst [vmem:[#allocation9 + $0x10] sm:$0xff] %v1153
    %1162 = vst [vmem:[#allocation9 + $0x18] sm:$0xff] %v1154
    %1163 = vst [vmem:[#allocation9 + $0x20] sm:$0xff] %v1155
    %1164 = vst [vmem:[#allocation9 + $0x28] sm:$0xff] %v1156
    %1165 = vst [vmem:[#allocation9 + $0x30] sm:$0xff] %v1157
    %1166 = vst [vmem:[#allocation9 + $0x38] sm:$0xff] %v1158
    %v1167 = vadd.f32 %v1111, %v334
    %v1168 = vadd.f32 %v1112, %v334
    %v1169 = vadd.f32 %v1113, %v334
    %v1170 = vadd.f32 %v1114, %v334
    %v1171 = vadd.f32 %v1115, %v334
    %v1172 = vadd.f32 %v1116, %v334
    %v1173 = vadd.f32 %v1117, %v334
    %v1174 = vadd.f32 %v1118, %v334
    %s1175 = scalar_lea.vmem [#allocation9], 64
    %1176 = vst [vmem:[%s1175] sm:$0xff] %v1167
    %1177 = vst [vmem:[%s1175 + $0x8] sm:$0xff] %v1168
    %1178 = vst [vmem:[%s1175 + $0x10] sm:$0xff] %v1169
    %1179 = vst [vmem:[%s1175 + $0x18] sm:$0xff] %v1170
    %1180 = vst [vmem:[%s1175 + $0x20] sm:$0xff] %v1171
    %1181 = vst [vmem:[%s1175 + $0x28] sm:$0xff] %v1172
    %1182 = vst [vmem:[%s1175 + $0x30] sm:$0xff] %v1173
    %1183 = vst [vmem:[%s1175 + $0x38] sm:$0xff] %v1174
    %v1184 = vadd.f32 %v1127, %v339
    %v1185 = vadd.f32 %v1128, %v339
    %v1186 = vadd.f32 %v1129, %v339
    %v1187 = vadd.f32 %v1130, %v339
    %v1188 = vadd.f32 %v1131, %v339
    %v1189 = vadd.f32 %v1132, %v339
    %v1190 = vadd.f32 %v1133, %v339
    %v1191 = vadd.f32 %v1134, %v339
    %s1192 = scalar_lea.vmem [#allocation9], 128
    %1193 = vst [vmem:[%s1192] sm:$0xff] %v1184
    %1194 = vst [vmem:[%s1192 + $0x8] sm:$0xff] %v1185
    %1195 = vst [vmem:[%s1192 + $0x10] sm:$0xff] %v1186
    %1196 = vst [vmem:[%s1192 + $0x18] sm:$0xff] %v1187
    %1197 = vst [vmem:[%s1192 + $0x20] sm:$0xff] %v1188
    %1198 = vst [vmem:[%s1192 + $0x28] sm:$0xff] %v1189
    %1199 = vst [vmem:[%s1192 + $0x30] sm:$0xff] %v1190
    %1200 = vst [vmem:[%s1192 + $0x38] sm:$0xff] %v1191
    %v1201 = vadd.f32 %v1143, %v344
    %v1202 = vadd.f32 %v1144, %v344
    %v1203 = vadd.f32 %v1145, %v344
    %v1204 = vadd.f32 %v1146, %v344
    %v1205 = vadd.f32 %v1147, %v344
    %v1206 = vadd.f32 %v1148, %v344
    %v1207 = vadd.f32 %v1149, %v344
    %v1208 = vadd.f32 %v1150, %v344
    %s1209 = scalar_lea.vmem [#allocation9], 192
    %1210 = vst [vmem:[%s1209] sm:$0xff] %v1201
    %1211 = vst [vmem:[%s1209 + $0x8] sm:$0xff] %v1202
    %1212 = vst [vmem:[%s1209 + $0x10] sm:$0xff] %v1203
    %1213 = vst [vmem:[%s1209 + $0x18] sm:$0xff] %v1204
    %1214 = vst [vmem:[%s1209 + $0x20] sm:$0xff] %v1205
    %1215 = vst [vmem:[%s1209 + $0x28] sm:$0xff] %v1206
    %1216 = vst [vmem:[%s1209 + $0x30] sm:$0xff] %v1207
    %1217 = vst [vmem:[%s1209 + $0x38] sm:$0xff] %v1208
    // Predicated region
    $region26: #{tpu_custom_call.1} parent=1 // pred_check
      _
    $region27: #{tpu_custom_call.1} parent=1 // pred_check_branch
      %1219 = sbr.rel (0) target = $region29
    $region28: #{tpu_custom_call.1} parent=1 // pred_region
      %s1221 = ssub.s32 4096, 4096
      %1222 = vsyncadd [#allocation4], %s1221
      %s1223 = sshll.u32 [#allocation9], 4
      %s1224 = int_to_ptr.vmem [resolvable:$true] %s1223
      %1229 = dma.vmem_to_hbm [thread:$0]  %s1224, 4096, %s3, [#allocation4], 128, 128, 8
    $region29: #{tpu_custom_call.1} parent=1 // pred_fallthru
      _
    // Predicated region
    $region30: #{tpu_custom_call.1} parent=1 // pred_check
      _
    $region31: #{tpu_custom_call.1} parent=1 // pred_check_branch
      %1231 = sbr.rel (0) target = $region33
    $region32: #{tpu_custom_call.1} parent=1 // pred_region
      %1232 = dma.done [#allocation4], 4096
    $region33: #{tpu_custom_call.1} parent=1 // pred_fallthru
      _
    %1233 = vsyncpa [#allocation3], 1
    %1234 = vsyncpa [#allocation4], 1
    %1235 = vsyncpa [#allocation5], 1
    %1236 = vsyncpa [#allocation8], 1

</llo_original>
